<compile_context>
chip_gen: v6e
topology: v6e:2x2x1
jax: 0.10.0
libtpu: 0.0.40
codegen_flags: <defaults>
</compile_context>

<pallas_src>
import jax
import jax.numpy as jnp
from jax.experimental import pallas as pl
from jax.experimental.pallas import tpu as pltpu

NEG_SLOPE = 0.2
NEG_INF = -1e9


# ---------------------------------------------------------------------------
# Fused Pallas kernel: conv1 -> ReLU -> conv2 -> linear, one invocation.
# ---------------------------------------------------------------------------
def _fused_gat_kernel(x_ref, adjb_ref,
                      w1_ref, wal1_ref, war1_ref, b1_ref,
                      w2_ref, wal2_ref, war2_ref, b2_ref,
                      wl_ref, bl_ref,
                      out_ref,
                      h1_ref, h2_ref):
    adj_bias = adjb_ref[...]                       # (N, N): 0 on edges, -1e9 off

    def gat_layer(x, w_all, w_al, w_ar, b, layer_out_ref):
        # x: (N, Fin); w_all: (Fin, H*Fout); w_al/w_ar: (Fin, H); b: (1, H*Fout)
        n_heads = w_al.shape[1]
        fout = w_all.shape[1] // n_heads
        # Head-batched projection + attention terms (MXU, one pass each).
        z_all = jnp.dot(x, w_all, preferred_element_type=jnp.float32)   # (N, H*Fout)
        el = jnp.dot(x, w_al, preferred_element_type=jnp.float32)       # (N, H) source
        er = jnp.dot(x, w_ar, preferred_element_type=jnp.float32)       # (N, H) dest
        for h in range(n_heads):                                        # static, H=2
            # e[i, j] = er[i] + el[j]
            e = er[:, h:h + 1] + jnp.transpose(el[:, h:h + 1])           # (N, N)
            e = jnp.where(e > 0, e, NEG_SLOPE * e)                       # LeakyReLU
            e = e + adj_bias                                             # mask non-edges
            m = jnp.max(e, axis=-1, keepdims=True)
            p = jnp.exp(e - m)                                           # unnormalised
            denom = jnp.sum(p, axis=-1, keepdims=True)
            z_h = z_all[:, h * fout:(h + 1) * fout]                      # (N, Fout)
            rst = jnp.dot(p, z_h, preferred_element_type=jnp.float32)    # (N, Fout)
            # Deferred normalisation: one (N,1) approx reciprocal (EUP slot).
            layer_out_ref[:, h * fout:(h + 1) * fout] = (
                rst * pl.reciprocal(denom, approx=True))
        return layer_out_ref[...] + b                                    # (N, H*Fout)

    x = x_ref[...]
    h1 = gat_layer(x, w1_ref[...], wal1_ref[...], war1_ref[...], b1_ref[...], h1_ref)
    h1 = jnp.maximum(h1, 0.0)                                            # fused ReLU
    h2 = gat_layer(h1, w2_ref[...], wal2_ref[...], war2_ref[...], b2_ref[...], h2_ref)
    out_ref[...] = (jnp.dot(h2, wl_ref[...], preferred_element_type=jnp.float32)
                    + bl_ref[...])


# ---------------------------------------------------------------------------
# Wrappers
# ---------------------------------------------------------------------------
def prepare_inputs(params, adj):
    """One-time folding of per-head params into head-batched operands and of
    the adjacency into an additive softmax bias (all plain JAX, outside the
    kernel)."""
    def fold(w, al, ar, b):
        H, fin, fout = w.shape
        w_all = jnp.transpose(w, (1, 0, 2)).reshape(fin, H * fout)      # (Fin, H*Fout)
        w_al = jnp.einsum("hio,ho->ih", w, al[:, 0, :])                 # (Fin, H)
        w_ar = jnp.einsum("hio,ho->ih", w, ar[:, 0, :])                 # (Fin, H)
        b_flat = b[:, 0, :].reshape(1, H * fout)                        # (1, H*Fout)
        return w_all, w_al, w_ar, b_flat

    w1_all, w1_al, w1_ar, b1 = fold(params["w1"], params["al1"],
                                    params["ar1"], params["b1"])
    w2_all, w2_al, w2_ar, b2 = fold(params["w2"], params["al2"],
                                    params["ar2"], params["b2"])
    adj_bias = jnp.where(adj > 0, 0.0, NEG_INF).astype(jnp.float32)     # (N, N)
    return dict(adj_bias=adj_bias,
                w1_all=w1_all, w1_al=w1_al, w1_ar=w1_ar, b1=b1,
                w2_all=w2_all, w2_al=w2_al, w2_ar=w2_ar, b2=b2,
                w_lin=params["w_lin_t"], b_lin=params["b_lin"])


def gat_forward(folded, in_feat):
    N = in_feat.shape[0]
    hid_total = folded["w1_all"].shape[1]     # H * hid_dim
    out_total = folded["w2_all"].shape[1]     # H * out_dim
    out_dim = folded["w_lin"].shape[1]

    vmem_specs = [pl.BlockSpec(memory_space=pltpu.MemorySpace.VMEM)
                  for _ in range(12)]
    return pl.pallas_call(
        _fused_gat_kernel,
        out_shape=jax.ShapeDtypeStruct((N, out_dim), jnp.float32),
        in_specs=vmem_specs,
        out_specs=pl.BlockSpec(memory_space=pltpu.MemorySpace.VMEM),
        scratch_shapes=[
            pltpu.VMEM((N, hid_total), jnp.float32),   # conv1 activations
            pltpu.VMEM((N, out_total), jnp.float32),   # conv2 activations
        ],
    )(in_feat, folded["adj_bias"],
      folded["w1_all"], folded["w1_al"], folded["w1_ar"], folded["b1"],
      folded["w2_all"], folded["w2_al"], folded["w2_ar"], folded["b2"],
      folded["w_lin"], folded["b_lin"])


# ---------------------------------------------------------------------------
# Deterministic parameter / input construction
# ---------------------------------------------------------------------------
def init_params(key, in_dim, hid_dim, out_dim, heads):
    ks = jax.random.split(key, 10)
    s = 0.1
    return {
        # conv1: in_dim -> hid_dim per head
        "w1":  s * jax.random.normal(ks[0], (heads, in_dim, hid_dim), jnp.float32),
        "al1": s * jax.random.normal(ks[1], (heads, 1, hid_dim), jnp.float32),
        "ar1": s * jax.random.normal(ks[2], (heads, 1, hid_dim), jnp.float32),
        "b1":  s * jax.random.normal(ks[3], (heads, 1, hid_dim), jnp.float32),
        # conv2: hid_dim*heads -> out_dim per head
        "w2":  s * jax.random.normal(ks[4], (heads, hid_dim * heads, out_dim), jnp.float32),
        "al2": s * jax.random.normal(ks[5], (heads, 1, out_dim), jnp.float32),
        "ar2": s * jax.random.normal(ks[6], (heads, 1, out_dim), jnp.float32),
        "b2":  s * jax.random.normal(ks[7], (heads, 1, out_dim), jnp.float32),
        # final linear: out_dim*heads -> out_dim (stored pre-transposed)
        "w_lin_t": s * jax.random.normal(ks[8], (out_dim * heads, out_dim), jnp.float32),
        "b_lin":   s * jax.random.normal(ks[9], (1, out_dim), jnp.float32),
    }


if __name__ == "__main__":
    N, IN_DIM, HID_DIM, OUT_DIM, HEADS = 16, 8, 8, 8, 2

    key = jax.random.PRNGKey(0)
    k_feat, k_adj, k_par = jax.random.split(key, 3)

    in_feat = jax.random.normal(k_feat, (N, IN_DIM), jnp.float32)

    # deterministic random graph with self-loops; A[i, j] = 1 iff edge j -> i
    # (self-loops guarantee every softmax row has at least one edge -> no NaNs)
    rand = jax.random.uniform(k_adj, (N, N))
    adj = jnp.where(rand < 0.3, 1.0, 0.0).astype(jnp.float32)
    adj = jnp.maximum(adj, jnp.eye(N, dtype=jnp.float32))

    params = init_params(k_par, IN_DIM, HID_DIM, OUT_DIM, HEADS)
    folded = prepare_inputs(params, adj)

    out = jax.jit(gat_forward)(folded, in_feat)
    jax.block_until_ready(out)
    assert out.shape == (N, OUT_DIM)
    print("KERNEL_OK")
</pallas_src>

<mosaic_0001>
module attributes {stable_mosaic.version = 11 : i64} {
  func.func @_fused_gat_kernel(%arg0: memref<16x8xf32, #tpu.memory_space<vmem>>, %arg1: memref<16x16xf32, #tpu.memory_space<vmem>>, %arg2: memref<8x16xf32, #tpu.memory_space<vmem>>, %arg3: memref<8x2xf32, #tpu.memory_space<vmem>>, %arg4: memref<8x2xf32, #tpu.memory_space<vmem>>, %arg5: memref<1x16xf32, #tpu.memory_space<vmem>>, %arg6: memref<16x16xf32, #tpu.memory_space<vmem>>, %arg7: memref<16x2xf32, #tpu.memory_space<vmem>>, %arg8: memref<16x2xf32, #tpu.memory_space<vmem>>, %arg9: memref<1x16xf32, #tpu.memory_space<vmem>>, %arg10: memref<16x8xf32, #tpu.memory_space<vmem>>, %arg11: memref<1x8xf32, #tpu.memory_space<vmem>>, %arg12: memref<16x8xf32, #tpu.memory_space<vmem>>, %arg13: memref<16x16xf32, #tpu.memory_space<vmem>>, %arg14: memref<16x16xf32, #tpu.memory_space<vmem>>) attributes {dimension_semantics = [], scalar_prefetch = 0 : i64, scratch_operands = 2 : i64, tpu.core_type = #tpu.core_type<tc>} {
    %c0 = arith.constant 0 : index
    %c0_0 = arith.constant 0 : index
    %0 = vector.load %arg1[%c0, %c0_0] : memref<16x16xf32, #tpu.memory_space<vmem>>, vector<16x16xf32>
    %c0_1 = arith.constant 0 : index
    %c0_2 = arith.constant 0 : index
    %1 = vector.load %arg0[%c0_1, %c0_2] : memref<16x8xf32, #tpu.memory_space<vmem>>, vector<16x8xf32>
    %c0_3 = arith.constant 0 : index
    %c0_4 = arith.constant 0 : index
    %2 = vector.load %arg2[%c0_3, %c0_4] : memref<8x16xf32, #tpu.memory_space<vmem>>, vector<8x16xf32>
    %c0_5 = arith.constant 0 : index
    %c0_6 = arith.constant 0 : index
    %3 = vector.load %arg3[%c0_5, %c0_6] : memref<8x2xf32, #tpu.memory_space<vmem>>, vector<8x2xf32>
    %c0_7 = arith.constant 0 : index
    %c0_8 = arith.constant 0 : index
    %4 = vector.load %arg4[%c0_7, %c0_8] : memref<8x2xf32, #tpu.memory_space<vmem>>, vector<8x2xf32>
    %c0_9 = arith.constant 0 : index
    %c0_10 = arith.constant 0 : index
    %5 = vector.load %arg5[%c0_9, %c0_10] : memref<1x16xf32, #tpu.memory_space<vmem>>, vector<1x16xf32>
    %cst = arith.constant dense<0.000000e+00> : vector<16x16xf32>
    %6 = tpu.matmul %1, %2, %cst {dimension_numbers = #tpu.dot_dimension_numbers<[1], [0], [0], [1], [0, 0, 1, 1], [], []>} : vector<16x8xf32>, vector<8x16xf32>, vector<16x16xf32> -> vector<16x16xf32>
    %cst_11 = arith.constant dense<0.000000e+00> : vector<16x2xf32>
    %7 = tpu.matmul %1, %3, %cst_11 {dimension_numbers = #tpu.dot_dimension_numbers<[1], [0], [0], [1], [0, 0, 1, 1], [], []>} : vector<16x8xf32>, vector<8x2xf32>, vector<16x2xf32> -> vector<16x2xf32>
    %cst_12 = arith.constant dense<0.000000e+00> : vector<16x2xf32>
    %8 = tpu.matmul %1, %4, %cst_12 {dimension_numbers = #tpu.dot_dimension_numbers<[1], [0], [0], [1], [0, 0, 1, 1], [], []>} : vector<16x8xf32>, vector<8x2xf32>, vector<16x2xf32> -> vector<16x2xf32>
    %9 = vector.extract_strided_slice %8 {offsets = [0, 0], sizes = [16, 1], strides = [1, 1]} : vector<16x2xf32> to vector<16x1xf32>
    %10 = vector.extract_strided_slice %7 {offsets = [0, 0], sizes = [16, 1], strides = [1, 1]} : vector<16x2xf32> to vector<16x1xf32>
    %11 = tpu.transpose %10, [1, 0] : vector<16x1xf32> -> vector<1x16xf32>
    %12 = vector.broadcast %9 : vector<16x1xf32> to vector<16x16xf32>
    %13 = vector.broadcast %11 : vector<1x16xf32> to vector<16x16xf32>
    %14 = arith.addf %12, %13 : vector<16x16xf32>
    %cst_13 = arith.constant 0.000000e+00 : f32
    %15 = vector.broadcast %cst_13 : f32 to vector<16x16xf32>
    %16 = arith.cmpf ogt, %14, %15 : vector<16x16xf32>
    %cst_14 = arith.constant 2.000000e-01 : f32
    %17 = vector.broadcast %cst_14 : f32 to vector<16x16xf32>
    %18 = arith.mulf %17, %14 : vector<16x16xf32>
    %19 = arith.select %16, %14, %18 : vector<16x16xi1>, vector<16x16xf32>
    %20 = arith.addf %19, %0 : vector<16x16xf32>
    %cst_15 = arith.constant dense<0xFF800000> : vector<16xf32>
    %21 = vector.multi_reduction <maximumf>, %20, %cst_15 [1] : vector<16x16xf32> to vector<16xf32>
    %22 = vector.shape_cast %21 : vector<16xf32> to vector<16x1xf32>
    %23 = vector.broadcast %22 : vector<16x1xf32> to vector<16x16xf32>
    %24 = arith.subf %20, %23 : vector<16x16xf32>
    %25 = math.exp %24 : vector<16x16xf32>
    %cst_16 = arith.constant dense<0.000000e+00> : vector<16xf32>
    %26 = vector.multi_reduction <add>, %25, %cst_16 [1] : vector<16x16xf32> to vector<16xf32>
    %27 = vector.shape_cast %26 : vector<16xf32> to vector<16x1xf32>
    %28 = vector.extract_strided_slice %6 {offsets = [0, 0], sizes = [16, 8], strides = [1, 1]} : vector<16x16xf32> to vector<16x8xf32>
    %cst_17 = arith.constant dense<0.000000e+00> : vector<16x8xf32>
    %29 = tpu.matmul %25, %28, %cst_17 {dimension_numbers = #tpu.dot_dimension_numbers<[1], [0], [0], [1], [0, 0, 1, 1], [], []>} : vector<16x16xf32>, vector<16x8xf32>, vector<16x8xf32> -> vector<16x8xf32>
    %30 = tpu.reciprocal %27 {approx = true} : vector<16x1xf32> -> vector<16x1xf32>
    %31 = vector.broadcast %30 : vector<16x1xf32> to vector<16x8xf32>
    %32 = arith.mulf %29, %31 : vector<16x8xf32>
    %c0_18 = arith.constant 0 : index
    %c0_19 = arith.constant 0 : index
    %33 = vector.load %arg13[%c0_18, %c0_19] : memref<16x16xf32, #tpu.memory_space<vmem>>, vector<16x8xf32>
    tpu.vector_store %arg13[%c0_18, %c0_19], %32 {strides = array<i32>} : memref<16x16xf32, #tpu.memory_space<vmem>>, vector<16x8xf32>,
    %34 = vector.extract_strided_slice %8 {offsets = [0, 1], sizes = [16, 1], strides = [1, 1]} : vector<16x2xf32> to vector<16x1xf32>
    %35 = vector.extract_strided_slice %7 {offsets = [0, 1], sizes = [16, 1], strides = [1, 1]} : vector<16x2xf32> to vector<16x1xf32>
    %36 = tpu.transpose %35, [1, 0] : vector<16x1xf32> -> vector<1x16xf32>
    %37 = vector.broadcast %34 : vector<16x1xf32> to vector<16x16xf32>
    %38 = vector.broadcast %36 : vector<1x16xf32> to vector<16x16xf32>
    %39 = arith.addf %37, %38 : vector<16x16xf32>
    %cst_20 = arith.constant 0.000000e+00 : f32
    %40 = vector.broadcast %cst_20 : f32 to vector<16x16xf32>
    %41 = arith.cmpf ogt, %39, %40 : vector<16x16xf32>
    %cst_21 = arith.constant 2.000000e-01 : f32
    %42 = vector.broadcast %cst_21 : f32 to vector<16x16xf32>
    %43 = arith.mulf %42, %39 : vector<16x16xf32>
    %44 = arith.select %41, %39, %43 : vector<16x16xi1>, vector<16x16xf32>
    %45 = arith.addf %44, %0 : vector<16x16xf32>
    %cst_22 = arith.constant dense<0xFF800000> : vector<16xf32>
    %46 = vector.multi_reduction <maximumf>, %45, %cst_22 [1] : vector<16x16xf32> to vector<16xf32>
    %47 = vector.shape_cast %46 : vector<16xf32> to vector<16x1xf32>
    %48 = vector.broadcast %47 : vector<16x1xf32> to vector<16x16xf32>
    %49 = arith.subf %45, %48 : vector<16x16xf32>
    %50 = math.exp %49 : vector<16x16xf32>
    %cst_23 = arith.constant dense<0.000000e+00> : vector<16xf32>
    %51 = vector.multi_reduction <add>, %50, %cst_23 [1] : vector<16x16xf32> to vector<16xf32>
    %52 = vector.shape_cast %51 : vector<16xf32> to vector<16x1xf32>
    %53 = vector.extract_strided_slice %6 {offsets = [0, 8], sizes = [16, 8], strides = [1, 1]} : vector<16x16xf32> to vector<16x8xf32>
    %cst_24 = arith.constant dense<0.000000e+00> : vector<16x8xf32>
    %54 = tpu.matmul %50, %53, %cst_24 {dimension_numbers = #tpu.dot_dimension_numbers<[1], [0], [0], [1], [0, 0, 1, 1], [], []>} : vector<16x16xf32>, vector<16x8xf32>, vector<16x8xf32> -> vector<16x8xf32>
    %55 = tpu.reciprocal %52 {approx = true} : vector<16x1xf32> -> vector<16x1xf32>
    %56 = vector.broadcast %55 : vector<16x1xf32> to vector<16x8xf32>
    %57 = arith.mulf %54, %56 : vector<16x8xf32>
    %c0_25 = arith.constant 0 : index
    %c8 = arith.constant 8 : index
    %58 = vector.load %arg13[%c0_25, %c8] : memref<16x16xf32, #tpu.memory_space<vmem>>, vector<16x8xf32>
    tpu.vector_store %arg13[%c0_25, %c8], %57 {strides = array<i32>} : memref<16x16xf32, #tpu.memory_space<vmem>>, vector<16x8xf32>,
    %c0_26 = arith.constant 0 : index
    %c0_27 = arith.constant 0 : index
    %59 = vector.load %arg13[%c0_26, %c0_27] : memref<16x16xf32, #tpu.memory_space<vmem>>, vector<16x16xf32>
    %60 = vector.broadcast %5 : vector<1x16xf32> to vector<16x16xf32>
    %61 = arith.addf %59, %60 : vector<16x16xf32>
    %cst_28 = arith.constant 0.000000e+00 : f32
    %62 = vector.broadcast %cst_28 : f32 to vector<16x16xf32>
    %63 = arith.maximumf %61, %62 : vector<16x16xf32>
    %c0_29 = arith.constant 0 : index
    %c0_30 = arith.constant 0 : index
    %64 = vector.load %arg6[%c0_29, %c0_30] : memref<16x16xf32, #tpu.memory_space<vmem>>, vector<16x16xf32>
    %c0_31 = arith.constant 0 : index
    %c0_32 = arith.constant 0 : index
    %65 = vector.load %arg7[%c0_31, %c0_32] : memref<16x2xf32, #tpu.memory_space<vmem>>, vector<16x2xf32>
    %c0_33 = arith.constant 0 : index
    %c0_34 = arith.constant 0 : index
    %66 = vector.load %arg8[%c0_33, %c0_34] : memref<16x2xf32, #tpu.memory_space<vmem>>, vector<16x2xf32>
    %c0_35 = arith.constant 0 : index
    %c0_36 = arith.constant 0 : index
    %67 = vector.load %arg9[%c0_35, %c0_36] : memref<1x16xf32, #tpu.memory_space<vmem>>, vector<1x16xf32>
    %cst_37 = arith.constant dense<0.000000e+00> : vector<16x16xf32>
    %68 = tpu.matmul %63, %64, %cst_37 {dimension_numbers = #tpu.dot_dimension_numbers<[1], [0], [0], [1], [0, 0, 1, 1], [], []>} : vector<16x16xf32>, vector<16x16xf32>, vector<16x16xf32> -> vector<16x16xf32>
    %cst_38 = arith.constant dense<0.000000e+00> : vector<16x2xf32>
    %69 = tpu.matmul %63, %65, %cst_38 {dimension_numbers = #tpu.dot_dimension_numbers<[1], [0], [0], [1], [0, 0, 1, 1], [], []>} : vector<16x16xf32>, vector<16x2xf32>, vector<16x2xf32> -> vector<16x2xf32>
    %cst_39 = arith.constant dense<0.000000e+00> : vector<16x2xf32>
    %70 = tpu.matmul %63, %66, %cst_39 {dimension_numbers = #tpu.dot_dimension_numbers<[1], [0], [0], [1], [0, 0, 1, 1], [], []>} : vector<16x16xf32>, vector<16x2xf32>, vector<16x2xf32> -> vector<16x2xf32>
    %71 = vector.extract_strided_slice %70 {offsets = [0, 0], sizes = [16, 1], strides = [1, 1]} : vector<16x2xf32> to vector<16x1xf32>
    %72 = vector.extract_strided_slice %69 {offsets = [0, 0], sizes = [16, 1], strides = [1, 1]} : vector<16x2xf32> to vector<16x1xf32>
    %73 = tpu.transpose %72, [1, 0] : vector<16x1xf32> -> vector<1x16xf32>
    %74 = vector.broadcast %71 : vector<16x1xf32> to vector<16x16xf32>
    %75 = vector.broadcast %73 : vector<1x16xf32> to vector<16x16xf32>
    %76 = arith.addf %74, %75 : vector<16x16xf32>
    %cst_40 = arith.constant 0.000000e+00 : f32
    %77 = vector.broadcast %cst_40 : f32 to vector<16x16xf32>
    %78 = arith.cmpf ogt, %76, %77 : vector<16x16xf32>
    %cst_41 = arith.constant 2.000000e-01 : f32
    %79 = vector.broadcast %cst_41 : f32 to vector<16x16xf32>
    %80 = arith.mulf %79, %76 : vector<16x16xf32>
    %81 = arith.select %78, %76, %80 : vector<16x16xi1>, vector<16x16xf32>
    %82 = arith.addf %81, %0 : vector<16x16xf32>
    %cst_42 = arith.constant dense<0xFF800000> : vector<16xf32>
    %83 = vector.multi_reduction <maximumf>, %82, %cst_42 [1] : vector<16x16xf32> to vector<16xf32>
    %84 = vector.shape_cast %83 : vector<16xf32> to vector<16x1xf32>
    %85 = vector.broadcast %84 : vector<16x1xf32> to vector<16x16xf32>
    %86 = arith.subf %82, %85 : vector<16x16xf32>
    %87 = math.exp %86 : vector<16x16xf32>
    %cst_43 = arith.constant dense<0.000000e+00> : vector<16xf32>
    %88 = vector.multi_reduction <add>, %87, %cst_43 [1] : vector<16x16xf32> to vector<16xf32>
    %89 = vector.shape_cast %88 : vector<16xf32> to vector<16x1xf32>
    %90 = vector.extract_strided_slice %68 {offsets = [0, 0], sizes = [16, 8], strides = [1, 1]} : vector<16x16xf32> to vector<16x8xf32>
    %cst_44 = arith.constant dense<0.000000e+00> : vector<16x8xf32>
    %91 = tpu.matmul %87, %90, %cst_44 {dimension_numbers = #tpu.dot_dimension_numbers<[1], [0], [0], [1], [0, 0, 1, 1], [], []>} : vector<16x16xf32>, vector<16x8xf32>, vector<16x8xf32> -> vector<16x8xf32>
    %92 = tpu.reciprocal %89 {approx = true} : vector<16x1xf32> -> vector<16x1xf32>
    %93 = vector.broadcast %92 : vector<16x1xf32> to vector<16x8xf32>
    %94 = arith.mulf %91, %93 : vector<16x8xf32>
    %c0_45 = arith.constant 0 : index
    %c0_46 = arith.constant 0 : index
    %95 = vector.load %arg14[%c0_45, %c0_46] : memref<16x16xf32, #tpu.memory_space<vmem>>, vector<16x8xf32>
    tpu.vector_store %arg14[%c0_45, %c0_46], %94 {strides = array<i32>} : memref<16x16xf32, #tpu.memory_space<vmem>>, vector<16x8xf32>,
    %96 = vector.extract_strided_slice %70 {offsets = [0, 1], sizes = [16, 1], strides = [1, 1]} : vector<16x2xf32> to vector<16x1xf32>
    %97 = vector.extract_strided_slice %69 {offsets = [0, 1], sizes = [16, 1], strides = [1, 1]} : vector<16x2xf32> to vector<16x1xf32>
    %98 = tpu.transpose %97, [1, 0] : vector<16x1xf32> -> vector<1x16xf32>
    %99 = vector.broadcast %96 : vector<16x1xf32> to vector<16x16xf32>
    %100 = vector.broadcast %98 : vector<1x16xf32> to vector<16x16xf32>
    %101 = arith.addf %99, %100 : vector<16x16xf32>
    %cst_47 = arith.constant 0.000000e+00 : f32
    %102 = vector.broadcast %cst_47 : f32 to vector<16x16xf32>
    %103 = arith.cmpf ogt, %101, %102 : vector<16x16xf32>
    %cst_48 = arith.constant 2.000000e-01 : f32
    %104 = vector.broadcast %cst_48 : f32 to vector<16x16xf32>
    %105 = arith.mulf %104, %101 : vector<16x16xf32>
    %106 = arith.select %103, %101, %105 : vector<16x16xi1>, vector<16x16xf32>
    %107 = arith.addf %106, %0 : vector<16x16xf32>
    %cst_49 = arith.constant dense<0xFF800000> : vector<16xf32>
    %108 = vector.multi_reduction <maximumf>, %107, %cst_49 [1] : vector<16x16xf32> to vector<16xf32>
    %109 = vector.shape_cast %108 : vector<16xf32> to vector<16x1xf32>
    %110 = vector.broadcast %109 : vector<16x1xf32> to vector<16x16xf32>
    %111 = arith.subf %107, %110 : vector<16x16xf32>
    %112 = math.exp %111 : vector<16x16xf32>
    %cst_50 = arith.constant dense<0.000000e+00> : vector<16xf32>
    %113 = vector.multi_reduction <add>, %112, %cst_50 [1] : vector<16x16xf32> to vector<16xf32>
    %114 = vector.shape_cast %113 : vector<16xf32> to vector<16x1xf32>
    %115 = vector.extract_strided_slice %68 {offsets = [0, 8], sizes = [16, 8], strides = [1, 1]} : vector<16x16xf32> to vector<16x8xf32>
    %cst_51 = arith.constant dense<0.000000e+00> : vector<16x8xf32>
    %116 = tpu.matmul %112, %115, %cst_51 {dimension_numbers = #tpu.dot_dimension_numbers<[1], [0], [0], [1], [0, 0, 1, 1], [], []>} : vector<16x16xf32>, vector<16x8xf32>, vector<16x8xf32> -> vector<16x8xf32>
    %117 = tpu.reciprocal %114 {approx = true} : vector<16x1xf32> -> vector<16x1xf32>
    %118 = vector.broadcast %117 : vector<16x1xf32> to vector<16x8xf32>
    %119 = arith.mulf %116, %118 : vector<16x8xf32>
    %c0_52 = arith.constant 0 : index
    %c8_53 = arith.constant 8 : index
    %120 = vector.load %arg14[%c0_52, %c8_53] : memref<16x16xf32, #tpu.memory_space<vmem>>, vector<16x8xf32>
    tpu.vector_store %arg14[%c0_52, %c8_53], %119 {strides = array<i32>} : memref<16x16xf32, #tpu.memory_space<vmem>>, vector<16x8xf32>,
    %c0_54 = arith.constant 0 : index
    %c0_55 = arith.constant 0 : index
    %121 = vector.load %arg14[%c0_54, %c0_55] : memref<16x16xf32, #tpu.memory_space<vmem>>, vector<16x16xf32>
    %122 = vector.broadcast %67 : vector<1x16xf32> to vector<16x16xf32>
    %123 = arith.addf %121, %122 : vector<16x16xf32>
    %c0_56 = arith.constant 0 : index
    %c0_57 = arith.constant 0 : index
    %124 = vector.load %arg10[%c0_56, %c0_57] : memref<16x8xf32, #tpu.memory_space<vmem>>, vector<16x8xf32>
    %cst_58 = arith.constant dense<0.000000e+00> : vector<16x8xf32>
    %125 = tpu.matmul %123, %124, %cst_58 {dimension_numbers = #tpu.dot_dimension_numbers<[1], [0], [0], [1], [0, 0, 1, 1], [], []>} : vector<16x16xf32>, vector<16x8xf32>, vector<16x8xf32> -> vector<16x8xf32>
    %c0_59 = arith.constant 0 : index
    %c0_60 = arith.constant 0 : index
    %126 = vector.load %arg11[%c0_59, %c0_60] : memref<1x8xf32, #tpu.memory_space<vmem>>, vector<1x8xf32>
    %127 = vector.broadcast %126 : vector<1x8xf32> to vector<16x8xf32>
    %128 = arith.addf %125, %127 : vector<16x8xf32>
    %c0_61 = arith.constant 0 : index
    %c0_62 = arith.constant 0 : index
    %129 = vector.load %arg12[%c0_61, %c0_62] : memref<16x8xf32, #tpu.memory_space<vmem>>, vector<16x8xf32>
    tpu.vector_store %arg12[%c0_61, %c0_62], %128 {strides = array<i32>} : memref<16x8xf32, #tpu.memory_space<vmem>>, vector<16x8xf32>,
    return
  }
}

</mosaic_0001>

<llo_original>
// kernel: gat_forward.1
$region0: #{gat_forward.1}
  #allocation0 [shape = 'u32[]', space=smem, size = 0x4, offset = 0x4, fixed_abs, tag = 'smem constant byte address 0x4 - core index']
  #allocation1 [shape = 'u32[144,128]{1,0:T(1,128)}', space=vmem, size = 0x12000, scoped, tag = 'internal scratch']
  #allocation2 [shape = 'f32[16,16]{1,0:T(8,128)}', space=vmem, size = 0x2000, scoped, tag = 'scratch operand']
  #allocation3 [shape = 'f32[16,16]{1,0:T(8,128)}', space=vmem, size = 0x2000, scoped, tag = 'scratch operand']
  %s0 = inlined_call_operand.vmem [shape: f32[16,8], index: 0, kind: input, shape index: {}]
  %s1 = inlined_call_operand.vmem [shape: f32[16,16], index: 1, kind: input, shape index: {}]
  %s2 = inlined_call_operand.vmem [shape: f32[8,16], index: 2, kind: input, shape index: {}]
  %s3 = inlined_call_operand.vmem [shape: f32[8,2], index: 3, kind: input, shape index: {}]
  %s4 = inlined_call_operand.vmem [shape: f32[8,2], index: 4, kind: input, shape index: {}]
  %s5 = inlined_call_operand.vmem [shape: f32[1,16], index: 5, kind: input, shape index: {}]
  %s6 = inlined_call_operand.vmem [shape: f32[16,16], index: 6, kind: input, shape index: {}]
  %s7 = inlined_call_operand.vmem [shape: f32[16,2], index: 7, kind: input, shape index: {}]
  %s8 = inlined_call_operand.vmem [shape: f32[16,2], index: 8, kind: input, shape index: {}]
  %s9 = inlined_call_operand.vmem [shape: f32[1,16], index: 9, kind: input, shape index: {}]
  %s10 = inlined_call_operand.vmem [shape: f32[16,8], index: 10, kind: input, shape index: {}]
  %s11 = inlined_call_operand.vmem [shape: f32[1,8], index: 11, kind: input, shape index: {}]
  %s12 = inlined_call_operand.vmem [shape: f32[16,8], index: 12, kind: output, shape index: {}]
  %s13 = sld [smem:[#allocation0]]
  $region58: #{gat_forward.1} parent=0
    _
  %s15 = ssub.s32 1, %s13
  %s16 = scalar_select 0, %s15, %s13
  // Predicated region
  $region2: #{gat_forward.1} parent=0 // pred_check
    _
  $region3: #{gat_forward.1} parent=0 // pred_check_branch
    %18 = sbr.rel (0) target = $region5
  $region4: #{gat_forward.1} parent=0 // pred_region
    _
  $region5: #{gat_forward.1} parent=0 // pred_fallthru
    _
  // Predicated region
  $region6: #{gat_forward.1} parent=0 // pred_check
    _
  $region7: #{gat_forward.1} parent=0 // pred_check_branch
    %20 = sbr.rel (0) target = $region9
  $region8: #{gat_forward.1} parent=0 // pred_region
    _
  $region9: #{gat_forward.1} parent=0 // pred_fallthru
    _
  // Predicated region
  $region10: #{gat_forward.1} parent=0 // pred_check
    _
  $region11: #{gat_forward.1} parent=0 // pred_check_branch
    %22 = sbr.rel (0) target = $region13
  $region12: #{gat_forward.1} parent=0 // pred_region
    _
  $region13: #{gat_forward.1} parent=0 // pred_fallthru
    _
  // Predicated region
  $region14: #{gat_forward.1} parent=0 // pred_check
    _
  $region15: #{gat_forward.1} parent=0 // pred_check_branch
    %24 = sbr.rel (0) target = $region17
  $region16: #{gat_forward.1} parent=0 // pred_region
    _
  $region17: #{gat_forward.1} parent=0 // pred_fallthru
    _
  // Predicated region
  $region18: #{gat_forward.1} parent=0 // pred_check
    _
  $region19: #{gat_forward.1} parent=0 // pred_check_branch
    %26 = sbr.rel (0) target = $region21
  $region20: #{gat_forward.1} parent=0 // pred_region
    _
  $region21: #{gat_forward.1} parent=0 // pred_fallthru
    _
  // Predicated region
  $region22: #{gat_forward.1} parent=0 // pred_check
    _
  $region23: #{gat_forward.1} parent=0 // pred_check_branch
    %28 = sbr.rel (0) target = $region25
  $region24: #{gat_forward.1} parent=0 // pred_region
    _
  $region25: #{gat_forward.1} parent=0 // pred_fallthru
    _
  // Predicated region
  $region26: #{gat_forward.1} parent=0 // pred_check
    _
  $region27: #{gat_forward.1} parent=0 // pred_check_branch
    %30 = sbr.rel (0) target = $region29
  $region28: #{gat_forward.1} parent=0 // pred_region
    _
  $region29: #{gat_forward.1} parent=0 // pred_fallthru
    _
  // Predicated region
  $region30: #{gat_forward.1} parent=0 // pred_check
    _
  $region31: #{gat_forward.1} parent=0 // pred_check_branch
    %32 = sbr.rel (0) target = $region33
  $region32: #{gat_forward.1} parent=0 // pred_region
    _
  $region33: #{gat_forward.1} parent=0 // pred_fallthru
    _
  // Predicated region
  $region34: #{gat_forward.1} parent=0 // pred_check
    _
  $region35: #{gat_forward.1} parent=0 // pred_check_branch
    %34 = sbr.rel (0) target = $region37
  $region36: #{gat_forward.1} parent=0 // pred_region
    _
  $region37: #{gat_forward.1} parent=0 // pred_fallthru
    _
  // Predicated region
  $region38: #{gat_forward.1} parent=0 // pred_check
    _
  $region39: #{gat_forward.1} parent=0 // pred_check_branch
    %36 = sbr.rel (0) target = $region41
  $region40: #{gat_forward.1} parent=0 // pred_region
    _
  $region41: #{gat_forward.1} parent=0 // pred_fallthru
    _
  // Predicated region
  $region42: #{gat_forward.1} parent=0 // pred_check
    _
  $region43: #{gat_forward.1} parent=0 // pred_check_branch
    %38 = sbr.rel (0) target = $region45
  $region44: #{gat_forward.1} parent=0 // pred_region
    _
  $region45: #{gat_forward.1} parent=0 // pred_fallthru
    _
  // Predicated region
  $region46: #{gat_forward.1} parent=0 // pred_check
    _
  $region47: #{gat_forward.1} parent=0 // pred_check_branch
    %40 = sbr.rel (0) target = $region49
  $region48: #{gat_forward.1} parent=0 // pred_region
    _
  $region49: #{gat_forward.1} parent=0 // pred_fallthru
    _
  %v41 = vld [vmem:[%s1] sm:$0xff]
  %v42 = vld [vmem:[%s1 + $0x8] sm:$0xff]
  %v43 = vld [vmem:[%s0] sm:$0xff]
  %v44 = vld [vmem:[%s0 + $0x8] sm:$0xff]
  %v45 = vld [vmem:[%s2] sm:$0xff]
  %v46 = vld [vmem:[%s3] sm:$0xff]
  %v47 = vld [vmem:[%s4] sm:$0xff]
  %v48 = vld [vmem:[%s5] sm:$0x1]
  %vm49 = vcmask 64512
  %v51 = vsel %vm49, %v43, 0
  %v54 = vsel %vm49, %v44, 0
  %56 = vmatprep.subr.mxu0 0.0
  %57 = vmatpush1.msra.mxu0 0.0
  %58 = vmatprep.subr.mxu0 0.0
  %59 = vmatpush1.msra.mxu0 0.0
  %60 = vmatprep.subr.mxu0 0.0
  %61 = vmatpush1.msra.mxu0 0.0
  %62 = vmatprep.subr.mxu0 0.0
  %63 = vmatpush1.msra.mxu0 0.0
  %64 = vmatprep.subr.mxu0 0.0
  %65 = vmatpush1.msra.mxu0 0.0
  %66 = vmatprep.subr.mxu0 0.0
  %67 = vmatpush1.msra.mxu0 0.0
  %68 = vmatprep.subr.mxu0 0.0
  %69 = vmatpush1.msra.mxu0 0.0
  %70 = vmatprep.subr.mxu0 0.0
  %71 = vmatpush1.msra.mxu0 0.0
  %72 = vmatprep.subr.mxu0 0.0
  %73 = vmatpush1.msra.mxu0 0.0
  %74 = vmatprep.subr.mxu0 0.0
  %75 = vmatpush1.msra.mxu0 0.0
  %76 = vmatprep.subr.mxu0 0.0
  %77 = vmatpush1.msra.mxu0 0.0
  %78 = vmatprep.subr.mxu0 0.0
  %79 = vmatpush1.msra.mxu0 0.0
  %80 = vmatprep.subr.mxu0 0.0
  %81 = vmatpush1.msra.mxu0 0.0
  %82 = vmatprep.subr.mxu0 0.0
  %83 = vmatpush1.msra.mxu0 0.0
  %84 = vmatprep.subr.mxu0 0.0
  %85 = vmatpush1.msra.mxu0 0.0
  %86 = vmatprep.subr.mxu0 0.0
  %87 = vmatpush1.msra.mxu0 %v45
  %88 = vmatprep.subr.mxu0 0.0
  %89 = vmatpush2.msra.mxu0 0.0
  %90 = vmatprep.subr.mxu0 0.0
  %91 = vmatpush2.msra.mxu0 0.0
  %92 = vmatprep.subr.mxu0 0.0
  %93 = vmatpush2.msra.mxu0 0.0
  %94 = vmatprep.subr.mxu0 0.0
  %95 = vmatpush2.msra.mxu0 0.0
  %96 = vmatprep.subr.mxu0 0.0
  %97 = vmatpush2.msra.mxu0 0.0
  %98 = vmatprep.subr.mxu0 0.0
  %99 = vmatpush2.msra.mxu0 0.0
  %100 = vmatprep.subr.mxu0 0.0
  %101 = vmatpush2.msra.mxu0 0.0
  %102 = vmatprep.subr.mxu0 0.0
  %103 = vmatpush2.msra.mxu0 0.0
  %104 = vmatprep.subr.mxu0 0.0
  %105 = vmatpush2.msra.mxu0 0.0
  %106 = vmatprep.subr.mxu0 0.0
  %107 = vmatpush2.msra.mxu0 0.0
  %108 = vmatprep.subr.mxu0 0.0
  %109 = vmatpush2.msra.mxu0 0.0
  %110 = vmatprep.subr.mxu0 0.0
  %111 = vmatpush2.msra.mxu0 0.0
  %112 = vmatprep.subr.mxu0 0.0
  %113 = vmatpush2.msra.mxu0 0.0
  %114 = vmatprep.subr.mxu0 0.0
  %115 = vmatpush2.msra.mxu0 0.0
  %116 = vmatprep.subr.mxu0 0.0
  %117 = vmatpush2.msra.mxu0 0.0
  %118 = vmatprep.subr.mxu0 0.0
  %119 = vmatpush2.msra.mxu0 0.0
  %120 = vmatprep.mubr.f32.mxu0 0.0
  %121 = vmatmul.mubr.f32.gmra.mxu0 %v51
  %v122 = vpop.f32.mrf.mxu0
  %v123 = vadd.f32 0.0, %v122
  %v124 = vpop.f32.mrf.mxu0
  %125 = vmatprep.mubr.f32.mxu0 0.0
  %126 = vmatmul.mubr.f32.gmra.mxu0 %v54
  %v127 = vpop.f32.mrf.mxu0
  %v128 = vadd.f32 0.0, %v127
  %v129 = vpop.f32.mrf.mxu0
  %130 = vdwg.mxu0
  %131 = vmatprep.subr.mxu0 0.0
  %132 = vmatpush1.msra.mxu0 0.0
  %133 = vmatprep.subr.mxu0 0.0
  %134 = vmatpush1.msra.mxu0 0.0
  %135 = vmatprep.subr.mxu0 0.0
  %136 = vmatpush1.msra.mxu0 0.0
  %137 = vmatprep.subr.mxu0 0.0
  %138 = vmatpush1.msra.mxu0 0.0
  %139 = vmatprep.subr.mxu0 0.0
  %140 = vmatpush1.msra.mxu0 0.0
  %141 = vmatprep.subr.mxu0 0.0
  %142 = vmatpush1.msra.mxu0 0.0
  %143 = vmatprep.subr.mxu0 0.0
  %144 = vmatpush1.msra.mxu0 0.0
  %145 = vmatprep.subr.mxu0 0.0
  %146 = vmatpush1.msra.mxu0 0.0
  %147 = vmatprep.subr.mxu0 0.0
  %148 = vmatpush1.msra.mxu0 0.0
  %149 = vmatprep.subr.mxu0 0.0
  %150 = vmatpush1.msra.mxu0 0.0
  %151 = vmatprep.subr.mxu0 0.0
  %152 = vmatpush1.msra.mxu0 0.0
  %153 = vmatprep.subr.mxu0 0.0
  %154 = vmatpush1.msra.mxu0 0.0
  %155 = vmatprep.subr.mxu0 0.0
  %156 = vmatpush1.msra.mxu0 0.0
  %157 = vmatprep.subr.mxu0 0.0
  %158 = vmatpush1.msra.mxu0 0.0
  %159 = vmatprep.subr.mxu0 0.0
  %160 = vmatpush1.msra.mxu0 0.0
  %161 = vmatprep.subr.mxu0 0.0
  %162 = vmatpush1.msra.mxu0 %v46
  %163 = vmatprep.subr.mxu0 0.0
  %164 = vmatpush2.msra.mxu0 0.0
  %165 = vmatprep.subr.mxu0 0.0
  %166 = vmatpush2.msra.mxu0 0.0
  %167 = vmatprep.subr.mxu0 0.0
  %168 = vmatpush2.msra.mxu0 0.0
  %169 = vmatprep.subr.mxu0 0.0
  %170 = vmatpush2.msra.mxu0 0.0
  %171 = vmatprep.subr.mxu0 0.0
  %172 = vmatpush2.msra.mxu0 0.0
  %173 = vmatprep.subr.mxu0 0.0
  %174 = vmatpush2.msra.mxu0 0.0
  %175 = vmatprep.subr.mxu0 0.0
  %176 = vmatpush2.msra.mxu0 0.0
  %177 = vmatprep.subr.mxu0 0.0
  %178 = vmatpush2.msra.mxu0 0.0
  %179 = vmatprep.subr.mxu0 0.0
  %180 = vmatpush2.msra.mxu0 0.0
  %181 = vmatprep.subr.mxu0 0.0
  %182 = vmatpush2.msra.mxu0 0.0
  %183 = vmatprep.subr.mxu0 0.0
  %184 = vmatpush2.msra.mxu0 0.0
  %185 = vmatprep.subr.mxu0 0.0
  %186 = vmatpush2.msra.mxu0 0.0
  %187 = vmatprep.subr.mxu0 0.0
  %188 = vmatpush2.msra.mxu0 0.0
  %189 = vmatprep.subr.mxu0 0.0
  %190 = vmatpush2.msra.mxu0 0.0
  %191 = vmatprep.subr.mxu0 0.0
  %192 = vmatpush2.msra.mxu0 0.0
  %193 = vmatprep.subr.mxu0 0.0
  %194 = vmatpush2.msra.mxu0 0.0
  %195 = vmatprep.mubr.f32.mxu0 0.0
  %196 = vmatmul.mubr.f32.gmra.mxu0 %v51
  %v197 = vpop.f32.mrf.mxu0
  %v198 = vadd.f32 0.0, %v197
  %v199 = vpop.f32.mrf.mxu0
  %200 = vmatprep.mubr.f32.mxu0 0.0
  %201 = vmatmul.mubr.f32.gmra.mxu0 %v54
  %v202 = vpop.f32.mrf.mxu0
  %v203 = vadd.f32 0.0, %v202
  %v204 = vpop.f32.mrf.mxu0
  %205 = vdwg.mxu0
  %206 = vmatprep.subr.mxu0 0.0
  %207 = vmatpush1.msra.mxu0 0.0
  %208 = vmatprep.subr.mxu0 0.0
  %209 = vmatpush1.msra.mxu0 0.0
  %210 = vmatprep.subr.mxu0 0.0
  %211 = vmatpush1.msra.mxu0 0.0
  %212 = vmatprep.subr.mxu0 0.0
  %213 = vmatpush1.msra.mxu0 0.0
  %214 = vmatprep.subr.mxu0 0.0
  %215 = vmatpush1.msra.mxu0 0.0
  %216 = vmatprep.subr.mxu0 0.0
  %217 = vmatpush1.msra.mxu0 0.0
  %218 = vmatprep.subr.mxu0 0.0
  %219 = vmatpush1.msra.mxu0 0.0
  %220 = vmatprep.subr.mxu0 0.0
  %221 = vmatpush1.msra.mxu0 0.0
  %222 = vmatprep.subr.mxu0 0.0
  %223 = vmatpush1.msra.mxu0 0.0
  %224 = vmatprep.subr.mxu0 0.0
  %225 = vmatpush1.msra.mxu0 0.0
  %226 = vmatprep.subr.mxu0 0.0
  %227 = vmatpush1.msra.mxu0 0.0
  %228 = vmatprep.subr.mxu0 0.0
  %229 = vmatpush1.msra.mxu0 0.0
  %230 = vmatprep.subr.mxu0 0.0
  %231 = vmatpush1.msra.mxu0 0.0
  %232 = vmatprep.subr.mxu0 0.0
  %233 = vmatpush1.msra.mxu0 0.0
  %234 = vmatprep.subr.mxu0 0.0
  %235 = vmatpush1.msra.mxu0 0.0
  %236 = vmatprep.subr.mxu0 0.0
  %237 = vmatpush1.msra.mxu0 %v47
  %238 = vmatprep.subr.mxu0 0.0
  %239 = vmatpush2.msra.mxu0 0.0
  %240 = vmatprep.subr.mxu0 0.0
  %241 = vmatpush2.msra.mxu0 0.0
  %242 = vmatprep.subr.mxu0 0.0
  %243 = vmatpush2.msra.mxu0 0.0
  %244 = vmatprep.subr.mxu0 0.0
  %245 = vmatpush2.msra.mxu0 0.0
  %246 = vmatprep.subr.mxu0 0.0
  %247 = vmatpush2.msra.mxu0 0.0
  %248 = vmatprep.subr.mxu0 0.0
  %249 = vmatpush2.msra.mxu0 0.0
  %250 = vmatprep.subr.mxu0 0.0
  %251 = vmatpush2.msra.mxu0 0.0
  %252 = vmatprep.subr.mxu0 0.0
  %253 = vmatpush2.msra.mxu0 0.0
  %254 = vmatprep.subr.mxu0 0.0
  %255 = vmatpush2.msra.mxu0 0.0
  %256 = vmatprep.subr.mxu0 0.0
  %257 = vmatpush2.msra.mxu0 0.0
  %258 = vmatprep.subr.mxu0 0.0
  %259 = vmatpush2.msra.mxu0 0.0
  %260 = vmatprep.subr.mxu0 0.0
  %261 = vmatpush2.msra.mxu0 0.0
  %262 = vmatprep.subr.mxu0 0.0
  %263 = vmatpush2.msra.mxu0 0.0
  %264 = vmatprep.subr.mxu0 0.0
  %265 = vmatpush2.msra.mxu0 0.0
  %266 = vmatprep.subr.mxu0 0.0
  %267 = vmatpush2.msra.mxu0 0.0
  %268 = vmatprep.subr.mxu0 0.0
  %269 = vmatpush2.msra.mxu0 0.0
  %270 = vmatprep.mubr.f32.mxu0 0.0
  %271 = vmatmul.mubr.f32.gmra.mxu0 %v51
  %v272 = vpop.f32.mrf.mxu0
  %v273 = vadd.f32 0.0, %v272
  %v274 = vpop.f32.mrf.mxu0
  %275 = vmatprep.mubr.f32.mxu0 0.0
  %276 = vmatmul.mubr.f32.gmra.mxu0 %v54
  %v277 = vpop.f32.mrf.mxu0
  %v278 = vadd.f32 0.0, %v277
  %v279 = vpop.f32.mrf.mxu0
  %280 = vdwg.mxu0
  %281 = vxpose.xlu0.b32.start [1/16] %v198, 128
  %282 = vxpose.xlu0.b32.cont [2/16] %v203, 128
  %283 = vxpose.xlu0.b32.cont [3/16] 0.0, 128
  %284 = vxpose.xlu0.b32.cont [4/16] 0.0, 128
  %285 = vxpose.xlu0.b32.cont [5/16] 0.0, 128
  %286 = vxpose.xlu0.b32.cont [6/16] 0.0, 128
  %287 = vxpose.xlu0.b32.cont [7/16] 0.0, 128
  %288 = vxpose.xlu0.b32.cont [8/16] 0.0, 128
  %289 = vxpose.xlu0.b32.cont [9/16] 0.0, 128
  %290 = vxpose.xlu0.b32.cont [10/16] 0.0, 128
  %291 = vxpose.xlu0.b32.cont [11/16] 0.0, 128
  %292 = vxpose.xlu0.b32.cont [12/16] 0.0, 128
  %293 = vxpose.xlu0.b32.cont [13/16] 0.0, 128
  %294 = vxpose.xlu0.b32.cont [14/16] 0.0, 128
  %295 = vxpose.xlu0.b32.cont [15/16] 0.0, 128
  %296 = vxpose.xlu0.b32.end [16/16] 0.0, 128
  %v297 = vpop.trf.xlu0
  %v298 = vpop.trf.xlu0
  %v299 = vpop.trf.xlu0
  %v300 = vpop.trf.xlu0
  %v301 = vpop.trf.xlu0
  %v302 = vpop.trf.xlu0
  %v303 = vpop.trf.xlu0
  %v304 = vpop.trf.xlu0
  %v305 = vpop.trf.xlu0
  %v306 = vpop.trf.xlu0
  %v307 = vpop.trf.xlu0
  %v308 = vpop.trf.xlu0
  %v309 = vpop.trf.xlu0
  %v310 = vpop.trf.xlu0
  %v311 = vpop.trf.xlu0
  %v312 = vpop.trf.xlu0
  %314 = vset.pattern.permute.xlu0 0
  %315 = vperm.xlu0 %314, %v273
  %v316 = vpop.permute.xlu0 %315
  %319 = vset.pattern.permute.xlu0 0
  %320 = vperm.xlu0 %319, %v278
  %v321 = vpop.permute.xlu0 %320
  %v323 = vlaneseq
  %v324 = vshrl.u32 %v323, 7
  %v325 = vsub.s32 0, %v324
  %v326 = vrot.slane %v297, %v325
  %v327 = vadd.f32 %v316, %v326
  %v328 = vadd.f32 %v321, %v326
  %vm329 = vcmp.gt.f32.partialorder %v327, 0.0
  %vm330 = vcmp.gt.f32.partialorder %v328, 0.0
  %v331 = vmul.f32 %v327, 0.2
  %v332 = vmul.f32 %v328, 0.2
  %v333 = vsel %vm329, %v327, %v331
  %v334 = vsel %vm330, %v328, %v332
  %v335 = vadd.f32 %v333, %v41
  %v336 = vadd.f32 %v334, %v42
  %vm337 = vcmask 130048
  %v338 = vsel %vm337, %v335, -inf
  %339 = vmax.xlane.f32.xlu0 %v338
  %v340 = vpop.xlane.xlu0 %339
  %v341 = vsel %vm337, %v336, -inf
  %342 = vmax.xlane.f32.xlu0 %v341
  %v343 = vpop.xlane.xlu0 %342
  %v344 = vsub.f32 %v335, %v340
  %v345 = vsub.f32 %v336, %v343
  %v346 = vmul.f32 %v344, 1.442695
  %v347 = vpow.pop %v346
  %v348 = vmul.f32 %v345, 1.442695
  %v349 = vpow.pop %v348
  %v350 = vsel %vm337, %v347, 0.0
  %351 = vadd.xlane.f32.xlu0 %v350
  %v352 = vpop.xlane.xlu0 %351
  %v353 = vsel %vm337, %v349, 0.0
  %354 = vadd.xlane.f32.xlu0 %v353
  %v355 = vpop.xlane.xlu0 %354
  %v357 = vsel %vm337, %v347, 0
  %v360 = vsel %vm337, %v349, 0
  %362 = vmatprep.subr.mxu0 0.0
  %363 = vmatpush1.msra.mxu0 0.0
  %364 = vmatprep.subr.mxu0 0.0
  %365 = vmatpush1.msra.mxu0 0.0
  %366 = vmatprep.subr.mxu0 0.0
  %367 = vmatpush1.msra.mxu0 0.0
  %368 = vmatprep.subr.mxu0 0.0
  %369 = vmatpush1.msra.mxu0 0.0
  %370 = vmatprep.subr.mxu0 0.0
  %371 = vmatpush1.msra.mxu0 0.0
  %372 = vmatprep.subr.mxu0 0.0
  %373 = vmatpush1.msra.mxu0 0.0
  %374 = vmatprep.subr.mxu0 0.0
  %375 = vmatpush1.msra.mxu0 0.0
  %376 = vmatprep.subr.mxu0 0.0
  %377 = vmatpush1.msra.mxu0 0.0
  %378 = vmatprep.subr.mxu0 0.0
  %379 = vmatpush1.msra.mxu0 0.0
  %380 = vmatprep.subr.mxu0 0.0
  %381 = vmatpush1.msra.mxu0 0.0
  %382 = vmatprep.subr.mxu0 0.0
  %383 = vmatpush1.msra.mxu0 0.0
  %384 = vmatprep.subr.mxu0 0.0
  %385 = vmatpush1.msra.mxu0 0.0
  %386 = vmatprep.subr.mxu0 0.0
  %387 = vmatpush1.msra.mxu0 0.0
  %388 = vmatprep.subr.mxu0 0.0
  %389 = vmatpush1.msra.mxu0 0.0
  %390 = vmatprep.subr.mxu0 0.0
  %391 = vmatpush1.msra.mxu0 %v128
  %392 = vmatprep.subr.mxu0 0.0
  %393 = vmatpush1.msra.mxu0 %v123
  %394 = vmatprep.subr.mxu0 0.0
  %395 = vmatpush2.msra.mxu0 0.0
  %396 = vmatprep.subr.mxu0 0.0
  %397 = vmatpush2.msra.mxu0 0.0
  %398 = vmatprep.subr.mxu0 0.0
  %399 = vmatpush2.msra.mxu0 0.0
  %400 = vmatprep.subr.mxu0 0.0
  %401 = vmatpush2.msra.mxu0 0.0
  %402 = vmatprep.subr.mxu0 0.0
  %403 = vmatpush2.msra.mxu0 0.0
  %404 = vmatprep.subr.mxu0 0.0
  %405 = vmatpush2.msra.mxu0 0.0
  %406 = vmatprep.subr.mxu0 0.0
  %407 = vmatpush2.msra.mxu0 0.0
  %408 = vmatprep.subr.mxu0 0.0
  %409 = vmatpush2.msra.mxu0 0.0
  %410 = vmatprep.subr.mxu0 0.0
  %411 = vmatpush2.msra.mxu0 0.0
  %412 = vmatprep.subr.mxu0 0.0
  %413 = vmatpush2.msra.mxu0 0.0
  %414 = vmatprep.subr.mxu0 0.0
  %415 = vmatpush2.msra.mxu0 0.0
  %416 = vmatprep.subr.mxu0 0.0
  %417 = vmatpush2.msra.mxu0 0.0
  %418 = vmatprep.subr.mxu0 0.0
  %419 = vmatpush2.msra.mxu0 0.0
  %420 = vmatprep.subr.mxu0 0.0
  %421 = vmatpush2.msra.mxu0 0.0
  %422 = vmatprep.subr.mxu0 0.0
  %423 = vmatpush2.msra.mxu0 0.0
  %424 = vmatprep.subr.mxu0 0.0
  %425 = vmatpush2.msra.mxu0 0.0
  %426 = vmatprep.mubr.f32.mxu0 0.0
  %427 = vmatmul.mubr.f32.gmra.mxu0 %v357
  %v428 = vpop.f32.mrf.mxu0
  %v429 = vadd.f32 0.0, %v428
  %v430 = vpop.f32.mrf.mxu0
  %431 = vmatprep.mubr.f32.mxu0 0.0
  %432 = vmatmul.mubr.f32.gmra.mxu0 %v360
  %v433 = vpop.f32.mrf.mxu0
  %v434 = vadd.f32 0.0, %v433
  %v435 = vpop.f32.mrf.mxu0
  %436 = vdwg.mxu0
  %v437 = vrcp.pop %v352
  %v438 = vrcp.pop %v355
  %v439 = vmul.f32 %v429, %v437
  %v440 = vmul.f32 %v434, %v438
  %441 = vst.msk [vmem:[#allocation2] sm:$0xff] %vm49, %v439
  %442 = vst.msk [vmem:[#allocation2 + $0x8] sm:$0xff] %vm49, %v440
  %445 = vrot.lane.b32.xlu0 %v198, 127
  %v446 = vpop.permute.xlu0 %445
  %447 = vrot.lane.b32.xlu0 %v203, 127
  %v448 = vpop.permute.xlu0 %447
  %451 = vxpose.xlu0.b32.start [1/16] %v446, 128
  %452 = vxpose.xlu0.b32.cont [2/16] %v448, 128
  %453 = vxpose.xlu0.b32.cont [3/16] 0.0, 128
  %454 = vxpose.xlu0.b32.cont [4/16] 0.0, 128
  %455 = vxpose.xlu0.b32.cont [5/16] 0.0, 128
  %456 = vxpose.xlu0.b32.cont [6/16] 0.0, 128
  %457 = vxpose.xlu0.b32.cont [7/16] 0.0, 128
  %458 = vxpose.xlu0.b32.cont [8/16] 0.0, 128
  %459 = vxpose.xlu0.b32.cont [9/16] 0.0, 128
  %460 = vxpose.xlu0.b32.cont [10/16] 0.0, 128
  %461 = vxpose.xlu0.b32.cont [11/16] 0.0, 128
  %462 = vxpose.xlu0.b32.cont [12/16] 0.0, 128
  %463 = vxpose.xlu0.b32.cont [13/16] 0.0, 128
  %464 = vxpose.xlu0.b32.cont [14/16] 0.0, 128
  %465 = vxpose.xlu0.b32.cont [15/16] 0.0, 128
  %466 = vxpose.xlu0.b32.end [16/16] 0.0, 128
  %v467 = vpop.trf.xlu0
  %v468 = vpop.trf.xlu0
  %v469 = vpop.trf.xlu0
  %v470 = vpop.trf.xlu0
  %v471 = vpop.trf.xlu0
  %v472 = vpop.trf.xlu0
  %v473 = vpop.trf.xlu0
  %v474 = vpop.trf.xlu0
  %v475 = vpop.trf.xlu0
  %v476 = vpop.trf.xlu0
  %v477 = vpop.trf.xlu0
  %v478 = vpop.trf.xlu0
  %v479 = vpop.trf.xlu0
  %v480 = vpop.trf.xlu0
  %v481 = vpop.trf.xlu0
  %v482 = vpop.trf.xlu0
  %483 = vset.pattern.permute.xlu0 1
  %484 = vperm.xlu0 %483, %v273
  %v485 = vpop.permute.xlu0 %484
  %487 = vset.pattern.permute.xlu0 1
  %488 = vperm.xlu0 %487, %v278
  %v489 = vpop.permute.xlu0 %488
  %v491 = vlaneseq
  %v492 = vshrl.u32 %v491, 7
  %v493 = vsub.s32 0, %v492
  %v494 = vrot.slane %v467, %v493
  %v495 = vadd.f32 %v485, %v494
  %v496 = vadd.f32 %v489, %v494
  %vm497 = vcmp.gt.f32.partialorder %v495, 0.0
  %vm498 = vcmp.gt.f32.partialorder %v496, 0.0
  %v499 = vmul.f32 %v495, 0.2
  %v500 = vmul.f32 %v496, 0.2
  %v501 = vsel %vm497, %v495, %v499
  %v502 = vsel %vm498, %v496, %v500
  %v503 = vadd.f32 %v501, %v41
  %v504 = vadd.f32 %v502, %v42
  %v505 = vsel %vm337, %v503, -inf
  %506 = vmax.xlane.f32.xlu0 %v505
  %v507 = vpop.xlane.xlu0 %506
  %v508 = vsel %vm337, %v504, -inf
  %509 = vmax.xlane.f32.xlu0 %v508
  %v510 = vpop.xlane.xlu0 %509
  %v511 = vsub.f32 %v503, %v507
  %v512 = vsub.f32 %v504, %v510
  %v513 = vmul.f32 %v511, 1.442695
  %v514 = vpow.pop %v513
  %v515 = vmul.f32 %v512, 1.442695
  %v516 = vpow.pop %v515
  %v517 = vsel %vm337, %v514, 0.0
  %518 = vadd.xlane.f32.xlu0 %v517
  %v519 = vpop.xlane.xlu0 %518
  %v520 = vsel %vm337, %v516, 0.0
  %521 = vadd.xlane.f32.xlu0 %v520
  %v522 = vpop.xlane.xlu0 %521
  %525 = vrot.lane.b32.xlu0 %v123, 120
  %v526 = vpop.permute.xlu0 %525
  %527 = vrot.lane.b32.xlu0 %v128, 120
  %v528 = vpop.permute.xlu0 %527
  %v532 = vsel %vm337, %v514, 0
  %v535 = vsel %vm337, %v516, 0
  %537 = vmatprep.subr.mxu0 0.0
  %538 = vmatpush1.msra.mxu0 0.0
  %539 = vmatprep.subr.mxu0 0.0
  %540 = vmatpush1.msra.mxu0 0.0
  %541 = vmatprep.subr.mxu0 0.0
  %542 = vmatpush1.msra.mxu0 0.0
  %543 = vmatprep.subr.mxu0 0.0
  %544 = vmatpush1.msra.mxu0 0.0
  %545 = vmatprep.subr.mxu0 0.0
  %546 = vmatpush1.msra.mxu0 0.0
  %547 = vmatprep.subr.mxu0 0.0
  %548 = vmatpush1.msra.mxu0 0.0
  %549 = vmatprep.subr.mxu0 0.0
  %550 = vmatpush1.msra.mxu0 0.0
  %551 = vmatprep.subr.mxu0 0.0
  %552 = vmatpush1.msra.mxu0 0.0
  %553 = vmatprep.subr.mxu0 0.0
  %554 = vmatpush1.msra.mxu0 0.0
  %555 = vmatprep.subr.mxu0 0.0
  %556 = vmatpush1.msra.mxu0 0.0
  %557 = vmatprep.subr.mxu0 0.0
  %558 = vmatpush1.msra.mxu0 0.0
  %559 = vmatprep.subr.mxu0 0.0
  %560 = vmatpush1.msra.mxu0 0.0
  %561 = vmatprep.subr.mxu0 0.0
  %562 = vmatpush1.msra.mxu0 0.0
  %563 = vmatprep.subr.mxu0 0.0
  %564 = vmatpush1.msra.mxu0 0.0
  %565 = vmatprep.subr.mxu0 0.0
  %566 = vmatpush1.msra.mxu0 %v528
  %567 = vmatprep.subr.mxu0 0.0
  %568 = vmatpush1.msra.mxu0 %v526
  %569 = vmatprep.subr.mxu0 0.0
  %570 = vmatpush2.msra.mxu0 0.0
  %571 = vmatprep.subr.mxu0 0.0
  %572 = vmatpush2.msra.mxu0 0.0
  %573 = vmatprep.subr.mxu0 0.0
  %574 = vmatpush2.msra.mxu0 0.0
  %575 = vmatprep.subr.mxu0 0.0
  %576 = vmatpush2.msra.mxu0 0.0
  %577 = vmatprep.subr.mxu0 0.0
  %578 = vmatpush2.msra.mxu0 0.0
  %579 = vmatprep.subr.mxu0 0.0
  %580 = vmatpush2.msra.mxu0 0.0
  %581 = vmatprep.subr.mxu0 0.0
  %582 = vmatpush2.msra.mxu0 0.0
  %583 = vmatprep.subr.mxu0 0.0
  %584 = vmatpush2.msra.mxu0 0.0
  %585 = vmatprep.subr.mxu0 0.0
  %586 = vmatpush2.msra.mxu0 0.0
  %587 = vmatprep.subr.mxu0 0.0
  %588 = vmatpush2.msra.mxu0 0.0
  %589 = vmatprep.subr.mxu0 0.0
  %590 = vmatpush2.msra.mxu0 0.0
  %591 = vmatprep.subr.mxu0 0.0
  %592 = vmatpush2.msra.mxu0 0.0
  %593 = vmatprep.subr.mxu0 0.0
  %594 = vmatpush2.msra.mxu0 0.0
  %595 = vmatprep.subr.mxu0 0.0
  %596 = vmatpush2.msra.mxu0 0.0
  %597 = vmatprep.subr.mxu0 0.0
  %598 = vmatpush2.msra.mxu0 0.0
  %599 = vmatprep.subr.mxu0 0.0
  %600 = vmatpush2.msra.mxu0 0.0
  %601 = vmatprep.mubr.f32.mxu0 0.0
  %602 = vmatmul.mubr.f32.gmra.mxu0 %v532
  %v603 = vpop.f32.mrf.mxu0
  %v604 = vadd.f32 0.0, %v603
  %v605 = vpop.f32.mrf.mxu0
  %606 = vmatprep.mubr.f32.mxu0 0.0
  %607 = vmatmul.mubr.f32.gmra.mxu0 %v535
  %v608 = vpop.f32.mrf.mxu0
  %v609 = vadd.f32 0.0, %v608
  %v610 = vpop.f32.mrf.mxu0
  %611 = vdwg.mxu0
  %v612 = vrcp.pop %v519
  %v613 = vrcp.pop %v522
  %v614 = vmul.f32 %v604, %v612
  %v615 = vmul.f32 %v609, %v613
  %618 = vrot.lane.b32.xlu0 %v614, 8
  %v619 = vpop.permute.xlu0 %618
  %620 = vrot.lane.b32.xlu0 %v615, 8
  %v621 = vpop.permute.xlu0 %620
  %vm624 = vcmask 130112
  %625 = vst.msk [vmem:[#allocation2] sm:$0xff] %vm624, %v619
  %626 = vst.msk [vmem:[#allocation2 + $0x8] sm:$0xff] %vm624, %v621
  %v627 = vld [vmem:[#allocation2] sm:$0xff]
  %v628 = vld [vmem:[#allocation2 + $0x8] sm:$0xff]
  %v630 = vlaneseq
  %v631 = vshrl.u32 %v630, 7
  %v632 = vsub.s32 0, %v631
  %v633 = vrot.slane %v48, %v632
  %v635 = vadd.f32 %v627, %v633
  %v636 = vadd.f32 %v628, %v633
  %v637 = vmax.f32 %v635, 0.0
  %v638 = vmax.f32 %v636, 0.0
  %v639 = vld [vmem:[%s6] sm:$0xff]
  %v640 = vld [vmem:[%s6 + $0x8] sm:$0xff]
  %v641 = vld [vmem:[%s7] sm:$0xff]
  %v642 = vld [vmem:[%s7 + $0x8] sm:$0xff]
  %v643 = vld [vmem:[%s8] sm:$0xff]
  %v644 = vld [vmem:[%s8 + $0x8] sm:$0xff]
  %v645 = vld [vmem:[%s9] sm:$0x1]
  %v647 = vsel %vm337, %v637, 0
  %v650 = vsel %vm337, %v638, 0
  %652 = vmatprep.subr.mxu0 0.0
  %653 = vmatpush1.msra.mxu0 0.0
  %654 = vmatprep.subr.mxu0 0.0
  %655 = vmatpush1.msra.mxu0 0.0
  %656 = vmatprep.subr.mxu0 0.0
  %657 = vmatpush1.msra.mxu0 0.0
  %658 = vmatprep.subr.mxu0 0.0
  %659 = vmatpush1.msra.mxu0 0.0
  %660 = vmatprep.subr.mxu0 0.0
  %661 = vmatpush1.msra.mxu0 0.0
  %662 = vmatprep.subr.mxu0 0.0
  %663 = vmatpush1.msra.mxu0 0.0
  %664 = vmatprep.subr.mxu0 0.0
  %665 = vmatpush1.msra.mxu0 0.0
  %666 = vmatprep.subr.mxu0 0.0
  %667 = vmatpush1.msra.mxu0 0.0
  %668 = vmatprep.subr.mxu0 0.0
  %669 = vmatpush1.msra.mxu0 0.0
  %670 = vmatprep.subr.mxu0 0.0
  %671 = vmatpush1.msra.mxu0 0.0
  %672 = vmatprep.subr.mxu0 0.0
  %673 = vmatpush1.msra.mxu0 0.0
  %674 = vmatprep.subr.mxu0 0.0
  %675 = vmatpush1.msra.mxu0 0.0
  %676 = vmatprep.subr.mxu0 0.0
  %677 = vmatpush1.msra.mxu0 0.0
  %678 = vmatprep.subr.mxu0 0.0
  %679 = vmatpush1.msra.mxu0 0.0
  %680 = vmatprep.subr.mxu0 0.0
  %681 = vmatpush1.msra.mxu0 %v640
  %682 = vmatprep.subr.mxu0 0.0
  %683 = vmatpush1.msra.mxu0 %v639
  %684 = vmatprep.subr.mxu0 0.0
  %685 = vmatpush2.msra.mxu0 0.0
  %686 = vmatprep.subr.mxu0 0.0
  %687 = vmatpush2.msra.mxu0 0.0
  %688 = vmatprep.subr.mxu0 0.0
  %689 = vmatpush2.msra.mxu0 0.0
  %690 = vmatprep.subr.mxu0 0.0
  %691 = vmatpush2.msra.mxu0 0.0
  %692 = vmatprep.subr.mxu0 0.0
  %693 = vmatpush2.msra.mxu0 0.0
  %694 = vmatprep.subr.mxu0 0.0
  %695 = vmatpush2.msra.mxu0 0.0
  %696 = vmatprep.subr.mxu0 0.0
  %697 = vmatpush2.msra.mxu0 0.0
  %698 = vmatprep.subr.mxu0 0.0
  %699 = vmatpush2.msra.mxu0 0.0
  %700 = vmatprep.subr.mxu0 0.0
  %701 = vmatpush2.msra.mxu0 0.0
  %702 = vmatprep.subr.mxu0 0.0
  %703 = vmatpush2.msra.mxu0 0.0
  %704 = vmatprep.subr.mxu0 0.0
  %705 = vmatpush2.msra.mxu0 0.0
  %706 = vmatprep.subr.mxu0 0.0
  %707 = vmatpush2.msra.mxu0 0.0
  %708 = vmatprep.subr.mxu0 0.0
  %709 = vmatpush2.msra.mxu0 0.0
  %710 = vmatprep.subr.mxu0 0.0
  %711 = vmatpush2.msra.mxu0 0.0
  %712 = vmatprep.subr.mxu0 0.0
  %713 = vmatpush2.msra.mxu0 0.0
  %714 = vmatprep.subr.mxu0 0.0
  %715 = vmatpush2.msra.mxu0 0.0
  %716 = vmatprep.mubr.f32.mxu0 0.0
  %717 = vmatmul.mubr.f32.gmra.mxu0 %v647
  %v718 = vpop.f32.mrf.mxu0
  %v719 = vadd.f32 0.0, %v718
  %v720 = vpop.f32.mrf.mxu0
  %721 = vmatprep.mubr.f32.mxu0 0.0
  %722 = vmatmul.mubr.f32.gmra.mxu0 %v650
  %v723 = vpop.f32.mrf.mxu0
  %v724 = vadd.f32 0.0, %v723
  %v725 = vpop.f32.mrf.mxu0
  %726 = vdwg.mxu0
  %727 = vmatprep.subr.mxu0 0.0
  %728 = vmatpush1.msra.mxu0 0.0
  %729 = vmatprep.subr.mxu0 0.0
  %730 = vmatpush1.msra.mxu0 0.0
  %731 = vmatprep.subr.mxu0 0.0
  %732 = vmatpush1.msra.mxu0 0.0
  %733 = vmatprep.subr.mxu0 0.0
  %734 = vmatpush1.msra.mxu0 0.0
  %735 = vmatprep.subr.mxu0 0.0
  %736 = vmatpush1.msra.mxu0 0.0
  %737 = vmatprep.subr.mxu0 0.0
  %738 = vmatpush1.msra.mxu0 0.0
  %739 = vmatprep.subr.mxu0 0.0
  %740 = vmatpush1.msra.mxu0 0.0
  %741 = vmatprep.subr.mxu0 0.0
  %742 = vmatpush1.msra.mxu0 0.0
  %743 = vmatprep.subr.mxu0 0.0
  %744 = vmatpush1.msra.mxu0 0.0
  %745 = vmatprep.subr.mxu0 0.0
  %746 = vmatpush1.msra.mxu0 0.0
  %747 = vmatprep.subr.mxu0 0.0
  %748 = vmatpush1.msra.mxu0 0.0
  %749 = vmatprep.subr.mxu0 0.0
  %750 = vmatpush1.msra.mxu0 0.0
  %751 = vmatprep.subr.mxu0 0.0
  %752 = vmatpush1.msra.mxu0 0.0
  %753 = vmatprep.subr.mxu0 0.0
  %754 = vmatpush1.msra.mxu0 0.0
  %755 = vmatprep.subr.mxu0 0.0
  %756 = vmatpush1.msra.mxu0 %v642
  %757 = vmatprep.subr.mxu0 0.0
  %758 = vmatpush1.msra.mxu0 %v641
  %759 = vmatprep.subr.mxu0 0.0
  %760 = vmatpush2.msra.mxu0 0.0
  %761 = vmatprep.subr.mxu0 0.0
  %762 = vmatpush2.msra.mxu0 0.0
  %763 = vmatprep.subr.mxu0 0.0
  %764 = vmatpush2.msra.mxu0 0.0
  %765 = vmatprep.subr.mxu0 0.0
  %766 = vmatpush2.msra.mxu0 0.0
  %767 = vmatprep.subr.mxu0 0.0
  %768 = vmatpush2.msra.mxu0 0.0
  %769 = vmatprep.subr.mxu0 0.0
  %770 = vmatpush2.msra.mxu0 0.0
  %771 = vmatprep.subr.mxu0 0.0
  %772 = vmatpush2.msra.mxu0 0.0
  %773 = vmatprep.subr.mxu0 0.0
  %774 = vmatpush2.msra.mxu0 0.0
  %775 = vmatprep.subr.mxu0 0.0
  %776 = vmatpush2.msra.mxu0 0.0
  %777 = vmatprep.subr.mxu0 0.0
  %778 = vmatpush2.msra.mxu0 0.0
  %779 = vmatprep.subr.mxu0 0.0
  %780 = vmatpush2.msra.mxu0 0.0
  %781 = vmatprep.subr.mxu0 0.0
  %782 = vmatpush2.msra.mxu0 0.0
  %783 = vmatprep.subr.mxu0 0.0
  %784 = vmatpush2.msra.mxu0 0.0
  %785 = vmatprep.subr.mxu0 0.0
  %786 = vmatpush2.msra.mxu0 0.0
  %787 = vmatprep.subr.mxu0 0.0
  %788 = vmatpush2.msra.mxu0 0.0
  %789 = vmatprep.subr.mxu0 0.0
  %790 = vmatpush2.msra.mxu0 0.0
  %791 = vmatprep.mubr.f32.mxu0 0.0
  %792 = vmatmul.mubr.f32.gmra.mxu0 %v647
  %v793 = vpop.f32.mrf.mxu0
  %v794 = vadd.f32 0.0, %v793
  %v795 = vpop.f32.mrf.mxu0
  %796 = vmatprep.mubr.f32.mxu0 0.0
  %797 = vmatmul.mubr.f32.gmra.mxu0 %v650
  %v798 = vpop.f32.mrf.mxu0
  %v799 = vadd.f32 0.0, %v798
  %v800 = vpop.f32.mrf.mxu0
  %801 = vdwg.mxu0
  %802 = vmatprep.subr.mxu0 0.0
  %803 = vmatpush1.msra.mxu0 0.0
  %804 = vmatprep.subr.mxu0 0.0
  %805 = vmatpush1.msra.mxu0 0.0
  %806 = vmatprep.subr.mxu0 0.0
  %807 = vmatpush1.msra.mxu0 0.0
  %808 = vmatprep.subr.mxu0 0.0
  %809 = vmatpush1.msra.mxu0 0.0
  %810 = vmatprep.subr.mxu0 0.0
  %811 = vmatpush1.msra.mxu0 0.0
  %812 = vmatprep.subr.mxu0 0.0
  %813 = vmatpush1.msra.mxu0 0.0
  %814 = vmatprep.subr.mxu0 0.0
  %815 = vmatpush1.msra.mxu0 0.0
  %816 = vmatprep.subr.mxu0 0.0
  %817 = vmatpush1.msra.mxu0 0.0
  %818 = vmatprep.subr.mxu0 0.0
  %819 = vmatpush1.msra.mxu0 0.0
  %820 = vmatprep.subr.mxu0 0.0
  %821 = vmatpush1.msra.mxu0 0.0
  %822 = vmatprep.subr.mxu0 0.0
  %823 = vmatpush1.msra.mxu0 0.0
  %824 = vmatprep.subr.mxu0 0.0
  %825 = vmatpush1.msra.mxu0 0.0
  %826 = vmatprep.subr.mxu0 0.0
  %827 = vmatpush1.msra.mxu0 0.0
  %828 = vmatprep.subr.mxu0 0.0
  %829 = vmatpush1.msra.mxu0 0.0
  %830 = vmatprep.subr.mxu0 0.0
  %831 = vmatpush1.msra.mxu0 %v644
  %832 = vmatprep.subr.mxu0 0.0
  %833 = vmatpush1.msra.mxu0 %v643
  %834 = vmatprep.subr.mxu0 0.0
  %835 = vmatpush2.msra.mxu0 0.0
  %836 = vmatprep.subr.mxu0 0.0
  %837 = vmatpush2.msra.mxu0 0.0
  %838 = vmatprep.subr.mxu0 0.0
  %839 = vmatpush2.msra.mxu0 0.0
  %840 = vmatprep.subr.mxu0 0.0
  %841 = vmatpush2.msra.mxu0 0.0
  %842 = vmatprep.subr.mxu0 0.0
  %843 = vmatpush2.msra.mxu0 0.0
  %844 = vmatprep.subr.mxu0 0.0
  %845 = vmatpush2.msra.mxu0 0.0
  %846 = vmatprep.subr.mxu0 0.0
  %847 = vmatpush2.msra.mxu0 0.0
  %848 = vmatprep.subr.mxu0 0.0
  %849 = vmatpush2.msra.mxu0 0.0
  %850 = vmatprep.subr.mxu0 0.0
  %851 = vmatpush2.msra.mxu0 0.0
  %852 = vmatprep.subr.mxu0 0.0
  %853 = vmatpush2.msra.mxu0 0.0
  %854 = vmatprep.subr.mxu0 0.0
  %855 = vmatpush2.msra.mxu0 0.0
  %856 = vmatprep.subr.mxu0 0.0
  %857 = vmatpush2.msra.mxu0 0.0
  %858 = vmatprep.subr.mxu0 0.0
  %859 = vmatpush2.msra.mxu0 0.0
  %860 = vmatprep.subr.mxu0 0.0
  %861 = vmatpush2.msra.mxu0 0.0
  %862 = vmatprep.subr.mxu0 0.0
  %863 = vmatpush2.msra.mxu0 0.0
  %864 = vmatprep.subr.mxu0 0.0
  %865 = vmatpush2.msra.mxu0 0.0
  %866 = vmatprep.mubr.f32.mxu0 0.0
  %867 = vmatmul.mubr.f32.gmra.mxu0 %v647
  %v868 = vpop.f32.mrf.mxu0
  %v869 = vadd.f32 0.0, %v868
  %v870 = vpop.f32.mrf.mxu0
  %871 = vmatprep.mubr.f32.mxu0 0.0
  %872 = vmatmul.mubr.f32.gmra.mxu0 %v650
  %v873 = vpop.f32.mrf.mxu0
  %v874 = vadd.f32 0.0, %v873
  %v875 = vpop.f32.mrf.mxu0
  %876 = vdwg.mxu0
  %877 = vxpose.xlu0.b32.start [1/16] %v794, 128
  %878 = vxpose.xlu0.b32.cont [2/16] %v799, 128
  %879 = vxpose.xlu0.b32.cont [3/16] 0.0, 128
  %880 = vxpose.xlu0.b32.cont [4/16] 0.0, 128
  %881 = vxpose.xlu0.b32.cont [5/16] 0.0, 128
  %882 = vxpose.xlu0.b32.cont [6/16] 0.0, 128
  %883 = vxpose.xlu0.b32.cont [7/16] 0.0, 128
  %884 = vxpose.xlu0.b32.cont [8/16] 0.0, 128
  %885 = vxpose.xlu0.b32.cont [9/16] 0.0, 128
  %886 = vxpose.xlu0.b32.cont [10/16] 0.0, 128
  %887 = vxpose.xlu0.b32.cont [11/16] 0.0, 128
  %888 = vxpose.xlu0.b32.cont [12/16] 0.0, 128
  %889 = vxpose.xlu0.b32.cont [13/16] 0.0, 128
  %890 = vxpose.xlu0.b32.cont [14/16] 0.0, 128
  %891 = vxpose.xlu0.b32.cont [15/16] 0.0, 128
  %892 = vxpose.xlu0.b32.end [16/16] 0.0, 128
  %v893 = vpop.trf.xlu0
  %v894 = vpop.trf.xlu0
  %v895 = vpop.trf.xlu0
  %v896 = vpop.trf.xlu0
  %v897 = vpop.trf.xlu0
  %v898 = vpop.trf.xlu0
  %v899 = vpop.trf.xlu0
  %v900 = vpop.trf.xlu0
  %v901 = vpop.trf.xlu0
  %v902 = vpop.trf.xlu0
  %v903 = vpop.trf.xlu0
  %v904 = vpop.trf.xlu0
  %v905 = vpop.trf.xlu0
  %v906 = vpop.trf.xlu0
  %v907 = vpop.trf.xlu0
  %v908 = vpop.trf.xlu0
  %910 = vset.pattern.permute.xlu0 0
  %911 = vperm.xlu0 %910, %v869
  %v912 = vpop.permute.xlu0 %911
  %915 = vset.pattern.permute.xlu0 0
  %916 = vperm.xlu0 %915, %v874
  %v917 = vpop.permute.xlu0 %916
  %v919 = vlaneseq
  %v920 = vshrl.u32 %v919, 7
  %v921 = vsub.s32 0, %v920
  %v922 = vrot.slane %v893, %v921
  %v923 = vadd.f32 %v912, %v922
  %v924 = vadd.f32 %v917, %v922
  %vm925 = vcmp.gt.f32.partialorder %v923, 0.0
  %vm926 = vcmp.gt.f32.partialorder %v924, 0.0
  %v927 = vmul.f32 %v923, 0.2
  %v928 = vmul.f32 %v924, 0.2
  %v929 = vsel %vm925, %v923, %v927
  %v930 = vsel %vm926, %v924, %v928
  %v931 = vadd.f32 %v929, %v41
  %v932 = vadd.f32 %v930, %v42
  %v933 = vsel %vm337, %v931, -inf
  %934 = vmax.xlane.f32.xlu0 %v933
  %v935 = vpop.xlane.xlu0 %934
  %v936 = vsel %vm337, %v932, -inf
  %937 = vmax.xlane.f32.xlu0 %v936
  %v938 = vpop.xlane.xlu0 %937
  %v939 = vsub.f32 %v931, %v935
  %v940 = vsub.f32 %v932, %v938
  %v941 = vmul.f32 %v939, 1.442695
  %v942 = vpow.pop %v941
  %v943 = vmul.f32 %v940, 1.442695
  %v944 = vpow.pop %v943
  %v945 = vsel %vm337, %v942, 0.0
  %946 = vadd.xlane.f32.xlu0 %v945
  %v947 = vpop.xlane.xlu0 %946
  %v948 = vsel %vm337, %v944, 0.0
  %949 = vadd.xlane.f32.xlu0 %v948
  %v950 = vpop.xlane.xlu0 %949
  %v952 = vsel %vm337, %v942, 0
  %v955 = vsel %vm337, %v944, 0
  %957 = vmatprep.subr.mxu0 0.0
  %958 = vmatpush1.msra.mxu0 0.0
  %959 = vmatprep.subr.mxu0 0.0
  %960 = vmatpush1.msra.mxu0 0.0
  %961 = vmatprep.subr.mxu0 0.0
  %962 = vmatpush1.msra.mxu0 0.0
  %963 = vmatprep.subr.mxu0 0.0
  %964 = vmatpush1.msra.mxu0 0.0
  %965 = vmatprep.subr.mxu0 0.0
  %966 = vmatpush1.msra.mxu0 0.0
  %967 = vmatprep.subr.mxu0 0.0
  %968 = vmatpush1.msra.mxu0 0.0
  %969 = vmatprep.subr.mxu0 0.0
  %970 = vmatpush1.msra.mxu0 0.0
  %971 = vmatprep.subr.mxu0 0.0
  %972 = vmatpush1.msra.mxu0 0.0
  %973 = vmatprep.subr.mxu0 0.0
  %974 = vmatpush1.msra.mxu0 0.0
  %975 = vmatprep.subr.mxu0 0.0
  %976 = vmatpush1.msra.mxu0 0.0
  %977 = vmatprep.subr.mxu0 0.0
  %978 = vmatpush1.msra.mxu0 0.0
  %979 = vmatprep.subr.mxu0 0.0
  %980 = vmatpush1.msra.mxu0 0.0
  %981 = vmatprep.subr.mxu0 0.0
  %982 = vmatpush1.msra.mxu0 0.0
  %983 = vmatprep.subr.mxu0 0.0
  %984 = vmatpush1.msra.mxu0 0.0
  %985 = vmatprep.subr.mxu0 0.0
  %986 = vmatpush1.msra.mxu0 %v724
  %987 = vmatprep.subr.mxu0 0.0
  %988 = vmatpush1.msra.mxu0 %v719
  %989 = vmatprep.subr.mxu0 0.0
  %990 = vmatpush2.msra.mxu0 0.0
  %991 = vmatprep.subr.mxu0 0.0
  %992 = vmatpush2.msra.mxu0 0.0
  %993 = vmatprep.subr.mxu0 0.0
  %994 = vmatpush2.msra.mxu0 0.0
  %995 = vmatprep.subr.mxu0 0.0
  %996 = vmatpush2.msra.mxu0 0.0
  %997 = vmatprep.subr.mxu0 0.0
  %998 = vmatpush2.msra.mxu0 0.0
  %999 = vmatprep.subr.mxu0 0.0
  %1000 = vmatpush2.msra.mxu0 0.0
  %1001 = vmatprep.subr.mxu0 0.0
  %1002 = vmatpush2.msra.mxu0 0.0
  %1003 = vmatprep.subr.mxu0 0.0
  %1004 = vmatpush2.msra.mxu0 0.0
  %1005 = vmatprep.subr.mxu0 0.0
  %1006 = vmatpush2.msra.mxu0 0.0
  %1007 = vmatprep.subr.mxu0 0.0
  %1008 = vmatpush2.msra.mxu0 0.0
  %1009 = vmatprep.subr.mxu0 0.0
  %1010 = vmatpush2.msra.mxu0 0.0
  %1011 = vmatprep.subr.mxu0 0.0
  %1012 = vmatpush2.msra.mxu0 0.0
  %1013 = vmatprep.subr.mxu0 0.0
  %1014 = vmatpush2.msra.mxu0 0.0
  %1015 = vmatprep.subr.mxu0 0.0
  %1016 = vmatpush2.msra.mxu0 0.0
  %1017 = vmatprep.subr.mxu0 0.0
  %1018 = vmatpush2.msra.mxu0 0.0
  %1019 = vmatprep.subr.mxu0 0.0
  %1020 = vmatpush2.msra.mxu0 0.0
  %1021 = vmatprep.mubr.f32.mxu0 0.0
  %1022 = vmatmul.mubr.f32.gmra.mxu0 %v952
  %v1023 = vpop.f32.mrf.mxu0
  %v1024 = vadd.f32 0.0, %v1023
  %v1025 = vpop.f32.mrf.mxu0
  %1026 = vmatprep.mubr.f32.mxu0 0.0
  %1027 = vmatmul.mubr.f32.gmra.mxu0 %v955
  %v1028 = vpop.f32.mrf.mxu0
  %v1029 = vadd.f32 0.0, %v1028
  %v1030 = vpop.f32.mrf.mxu0
  %1031 = vdwg.mxu0
  %v1032 = vrcp.pop %v947
  %v1033 = vrcp.pop %v950
  %v1034 = vmul.f32 %v1024, %v1032
  %v1035 = vmul.f32 %v1029, %v1033
  %1036 = vst.msk [vmem:[#allocation3] sm:$0xff] %vm49, %v1034
  %1037 = vst.msk [vmem:[#allocation3 + $0x8] sm:$0xff] %vm49, %v1035
  %1040 = vrot.lane.b32.xlu0 %v794, 127
  %v1041 = vpop.permute.xlu0 %1040
  %1042 = vrot.lane.b32.xlu0 %v799, 127
  %v1043 = vpop.permute.xlu0 %1042
  %1046 = vxpose.xlu0.b32.start [1/16] %v1041, 128
  %1047 = vxpose.xlu0.b32.cont [2/16] %v1043, 128
  %1048 = vxpose.xlu0.b32.cont [3/16] 0.0, 128
  %1049 = vxpose.xlu0.b32.cont [4/16] 0.0, 128
  %1050 = vxpose.xlu0.b32.cont [5/16] 0.0, 128
  %1051 = vxpose.xlu0.b32.cont [6/16] 0.0, 128
  %1052 = vxpose.xlu0.b32.cont [7/16] 0.0, 128
  %1053 = vxpose.xlu0.b32.cont [8/16] 0.0, 128
  %1054 = vxpose.xlu0.b32.cont [9/16] 0.0, 128
  %1055 = vxpose.xlu0.b32.cont [10/16] 0.0, 128
  %1056 = vxpose.xlu0.b32.cont [11/16] 0.0, 128
  %1057 = vxpose.xlu0.b32.cont [12/16] 0.0, 128
  %1058 = vxpose.xlu0.b32.cont [13/16] 0.0, 128
  %1059 = vxpose.xlu0.b32.cont [14/16] 0.0, 128
  %1060 = vxpose.xlu0.b32.cont [15/16] 0.0, 128
  %1061 = vxpose.xlu0.b32.end [16/16] 0.0, 128
  %v1062 = vpop.trf.xlu0
  %v1063 = vpop.trf.xlu0
  %v1064 = vpop.trf.xlu0
  %v1065 = vpop.trf.xlu0
  %v1066 = vpop.trf.xlu0
  %v1067 = vpop.trf.xlu0
  %v1068 = vpop.trf.xlu0
  %v1069 = vpop.trf.xlu0
  %v1070 = vpop.trf.xlu0
  %v1071 = vpop.trf.xlu0
  %v1072 = vpop.trf.xlu0
  %v1073 = vpop.trf.xlu0
  %v1074 = vpop.trf.xlu0
  %v1075 = vpop.trf.xlu0
  %v1076 = vpop.trf.xlu0
  %v1077 = vpop.trf.xlu0
  %1078 = vset.pattern.permute.xlu0 1
  %1079 = vperm.xlu0 %1078, %v869
  %v1080 = vpop.permute.xlu0 %1079
  %1082 = vset.pattern.permute.xlu0 1
  %1083 = vperm.xlu0 %1082, %v874
  %v1084 = vpop.permute.xlu0 %1083
  %v1086 = vlaneseq
  %v1087 = vshrl.u32 %v1086, 7
  %v1088 = vsub.s32 0, %v1087
  %v1089 = vrot.slane %v1062, %v1088
  %v1090 = vadd.f32 %v1080, %v1089
  %v1091 = vadd.f32 %v1084, %v1089
  %vm1092 = vcmp.gt.f32.partialorder %v1090, 0.0
  %vm1093 = vcmp.gt.f32.partialorder %v1091, 0.0
  %v1094 = vmul.f32 %v1090, 0.2
  %v1095 = vmul.f32 %v1091, 0.2
  %v1096 = vsel %vm1092, %v1090, %v1094
  %v1097 = vsel %vm1093, %v1091, %v1095
  %v1098 = vadd.f32 %v1096, %v41
  %v1099 = vadd.f32 %v1097, %v42
  %v1100 = vsel %vm337, %v1098, -inf
  %1101 = vmax.xlane.f32.xlu0 %v1100
  %v1102 = vpop.xlane.xlu0 %1101
  %v1103 = vsel %vm337, %v1099, -inf
  %1104 = vmax.xlane.f32.xlu0 %v1103
  %v1105 = vpop.xlane.xlu0 %1104
  %v1106 = vsub.f32 %v1098, %v1102
  %v1107 = vsub.f32 %v1099, %v1105
  %v1108 = vmul.f32 %v1106, 1.442695
  %v1109 = vpow.pop %v1108
  %v1110 = vmul.f32 %v1107, 1.442695
  %v1111 = vpow.pop %v1110
  %v1112 = vsel %vm337, %v1109, 0.0
  %1113 = vadd.xlane.f32.xlu0 %v1112
  %v1114 = vpop.xlane.xlu0 %1113
  %v1115 = vsel %vm337, %v1111, 0.0
  %1116 = vadd.xlane.f32.xlu0 %v1115
  %v1117 = vpop.xlane.xlu0 %1116
  %1120 = vrot.lane.b32.xlu0 %v719, 120
  %v1121 = vpop.permute.xlu0 %1120
  %1122 = vrot.lane.b32.xlu0 %v724, 120
  %v1123 = vpop.permute.xlu0 %1122
  %v1127 = vsel %vm337, %v1109, 0
  %v1130 = vsel %vm337, %v1111, 0
  %1132 = vmatprep.subr.mxu0 0.0
  %1133 = vmatpush1.msra.mxu0 0.0
  %1134 = vmatprep.subr.mxu0 0.0
  %1135 = vmatpush1.msra.mxu0 0.0
  %1136 = vmatprep.subr.mxu0 0.0
  %1137 = vmatpush1.msra.mxu0 0.0
  %1138 = vmatprep.subr.mxu0 0.0
  %1139 = vmatpush1.msra.mxu0 0.0
  %1140 = vmatprep.subr.mxu0 0.0
  %1141 = vmatpush1.msra.mxu0 0.0
  %1142 = vmatprep.subr.mxu0 0.0
  %1143 = vmatpush1.msra.mxu0 0.0
  %1144 = vmatprep.subr.mxu0 0.0
  %1145 = vmatpush1.msra.mxu0 0.0
  %1146 = vmatprep.subr.mxu0 0.0
  %1147 = vmatpush1.msra.mxu0 0.0
  %1148 = vmatprep.subr.mxu0 0.0
  %1149 = vmatpush1.msra.mxu0 0.0
  %1150 = vmatprep.subr.mxu0 0.0
  %1151 = vmatpush1.msra.mxu0 0.0
  %1152 = vmatprep.subr.mxu0 0.0
  %1153 = vmatpush1.msra.mxu0 0.0
  %1154 = vmatprep.subr.mxu0 0.0
  %1155 = vmatpush1.msra.mxu0 0.0
  %1156 = vmatprep.subr.mxu0 0.0
  %1157 = vmatpush1.msra.mxu0 0.0
  %1158 = vmatprep.subr.mxu0 0.0
  %1159 = vmatpush1.msra.mxu0 0.0
  %1160 = vmatprep.subr.mxu0 0.0
  %1161 = vmatpush1.msra.mxu0 %v1123
  %1162 = vmatprep.subr.mxu0 0.0
  %1163 = vmatpush1.msra.mxu0 %v1121
  %1164 = vmatprep.subr.mxu0 0.0
  %1165 = vmatpush2.msra.mxu0 0.0
  %1166 = vmatprep.subr.mxu0 0.0
  %1167 = vmatpush2.msra.mxu0 0.0
  %1168 = vmatprep.subr.mxu0 0.0
  %1169 = vmatpush2.msra.mxu0 0.0
  %1170 = vmatprep.subr.mxu0 0.0
  %1171 = vmatpush2.msra.mxu0 0.0
  %1172 = vmatprep.subr.mxu0 0.0
  %1173 = vmatpush2.msra.mxu0 0.0
  %1174 = vmatprep.subr.mxu0 0.0
  %1175 = vmatpush2.msra.mxu0 0.0
  %1176 = vmatprep.subr.mxu0 0.0
  %1177 = vmatpush2.msra.mxu0 0.0
  %1178 = vmatprep.subr.mxu0 0.0
  %1179 = vmatpush2.msra.mxu0 0.0
  %1180 = vmatprep.subr.mxu0 0.0
  %1181 = vmatpush2.msra.mxu0 0.0
  %1182 = vmatprep.subr.mxu0 0.0
  %1183 = vmatpush2.msra.mxu0 0.0
  %1184 = vmatprep.subr.mxu0 0.0
  %1185 = vmatpush2.msra.mxu0 0.0
  %1186 = vmatprep.subr.mxu0 0.0
  %1187 = vmatpush2.msra.mxu0 0.0
  %1188 = vmatprep.subr.mxu0 0.0
  %1189 = vmatpush2.msra.mxu0 0.0
  %1190 = vmatprep.subr.mxu0 0.0
  %1191 = vmatpush2.msra.mxu0 0.0
  %1192 = vmatprep.subr.mxu0 0.0
  %1193 = vmatpush2.msra.mxu0 0.0
  %1194 = vmatprep.subr.mxu0 0.0
  %1195 = vmatpush2.msra.mxu0 0.0
  %1196 = vmatprep.mubr.f32.mxu0 0.0
  %1197 = vmatmul.mubr.f32.gmra.mxu0 %v1127
  %v1198 = vpop.f32.mrf.mxu0
  %v1199 = vadd.f32 0.0, %v1198
  %v1200 = vpop.f32.mrf.mxu0
  %1201 = vmatprep.mubr.f32.mxu0 0.0
  %1202 = vmatmul.mubr.f32.gmra.mxu0 %v1130
  %v1203 = vpop.f32.mrf.mxu0
  %v1204 = vadd.f32 0.0, %v1203
  %v1205 = vpop.f32.mrf.mxu0
  %1206 = vdwg.mxu0
  %v1207 = vrcp.pop %v1114
  %v1208 = vrcp.pop %v1117
  %v1209 = vmul.f32 %v1199, %v1207
  %v1210 = vmul.f32 %v1204, %v1208
  %1213 = vrot.lane.b32.xlu0 %v1209, 8
  %v1214 = vpop.permute.xlu0 %1213
  %1215 = vrot.lane.b32.xlu0 %v1210, 8
  %v1216 = vpop.permute.xlu0 %1215
  %1219 = vst.msk [vmem:[#allocation3] sm:$0xff] %vm624, %v1214
  %1220 = vst.msk [vmem:[#allocation3 + $0x8] sm:$0xff] %vm624, %v1216
  %v1221 = vld [vmem:[#allocation3] sm:$0xff]
  %v1222 = vld [vmem:[#allocation3 + $0x8] sm:$0xff]
  %v1224 = vlaneseq
  %v1225 = vshrl.u32 %v1224, 7
  %v1226 = vsub.s32 0, %v1225
  %v1227 = vrot.slane %v645, %v1226
  %v1229 = vadd.f32 %v1221, %v1227
  %v1230 = vadd.f32 %v1222, %v1227
  %v1231 = vld [vmem:[%s10] sm:$0xff]
  %v1232 = vld [vmem:[%s10 + $0x8] sm:$0xff]
  %v1233 = vld [vmem:[%s11] sm:$0x1]
  %v1235 = vlaneseq
  %v1236 = vshrl.u32 %v1235, 7
  %v1237 = vsub.s32 0, %v1236
  %v1238 = vrot.slane %v1233, %v1237
  %v1241 = vsel %vm337, %v1229, 0
  %v1244 = vsel %vm337, %v1230, 0
  %1246 = vmatprep.subr.mxu0 0.0
  %1247 = vmatpush1.msra.mxu0 0.0
  %1248 = vmatprep.subr.mxu0 0.0
  %1249 = vmatpush1.msra.mxu0 0.0
  %1250 = vmatprep.subr.mxu0 0.0
  %1251 = vmatpush1.msra.mxu0 0.0
  %1252 = vmatprep.subr.mxu0 0.0
  %1253 = vmatpush1.msra.mxu0 0.0
  %1254 = vmatprep.subr.mxu0 0.0
  %1255 = vmatpush1.msra.mxu0 0.0
  %1256 = vmatprep.subr.mxu0 0.0
  %1257 = vmatpush1.msra.mxu0 0.0
  %1258 = vmatprep.subr.mxu0 0.0
  %1259 = vmatpush1.msra.mxu0 0.0
  %1260 = vmatprep.subr.mxu0 0.0
  %1261 = vmatpush1.msra.mxu0 0.0
  %1262 = vmatprep.subr.mxu0 0.0
  %1263 = vmatpush1.msra.mxu0 0.0
  %1264 = vmatprep.subr.mxu0 0.0
  %1265 = vmatpush1.msra.mxu0 0.0
  %1266 = vmatprep.subr.mxu0 0.0
  %1267 = vmatpush1.msra.mxu0 0.0
  %1268 = vmatprep.subr.mxu0 0.0
  %1269 = vmatpush1.msra.mxu0 0.0
  %1270 = vmatprep.subr.mxu0 0.0
  %1271 = vmatpush1.msra.mxu0 0.0
  %1272 = vmatprep.subr.mxu0 0.0
  %1273 = vmatpush1.msra.mxu0 0.0
  %1274 = vmatprep.subr.mxu0 0.0
  %1275 = vmatpush1.msra.mxu0 %v1232
  %1276 = vmatprep.subr.mxu0 0.0
  %1277 = vmatpush1.msra.mxu0 %v1231
  %1278 = vmatprep.subr.mxu0 0.0
  %1279 = vmatpush2.msra.mxu0 0.0
  %1280 = vmatprep.subr.mxu0 0.0
  %1281 = vmatpush2.msra.mxu0 0.0
  %1282 = vmatprep.subr.mxu0 0.0
  %1283 = vmatpush2.msra.mxu0 0.0
  %1284 = vmatprep.subr.mxu0 0.0
  %1285 = vmatpush2.msra.mxu0 0.0
  %1286 = vmatprep.subr.mxu0 0.0
  %1287 = vmatpush2.msra.mxu0 0.0
  %1288 = vmatprep.subr.mxu0 0.0
  %1289 = vmatpush2.msra.mxu0 0.0
  %1290 = vmatprep.subr.mxu0 0.0
  %1291 = vmatpush2.msra.mxu0 0.0
  %1292 = vmatprep.subr.mxu0 0.0
  %1293 = vmatpush2.msra.mxu0 0.0
  %1294 = vmatprep.subr.mxu0 0.0
  %1295 = vmatpush2.msra.mxu0 0.0
  %1296 = vmatprep.subr.mxu0 0.0
  %1297 = vmatpush2.msra.mxu0 0.0
  %1298 = vmatprep.subr.mxu0 0.0
  %1299 = vmatpush2.msra.mxu0 0.0
  %1300 = vmatprep.subr.mxu0 0.0
  %1301 = vmatpush2.msra.mxu0 0.0
  %1302 = vmatprep.subr.mxu0 0.0
  %1303 = vmatpush2.msra.mxu0 0.0
  %1304 = vmatprep.subr.mxu0 0.0
  %1305 = vmatpush2.msra.mxu0 0.0
  %1306 = vmatprep.subr.mxu0 0.0
  %1307 = vmatpush2.msra.mxu0 0.0
  %1308 = vmatprep.subr.mxu0 0.0
  %1309 = vmatpush2.msra.mxu0 0.0
  %1310 = vmatprep.mubr.f32.mxu0 0.0
  %1311 = vmatmul.mubr.f32.gmra.mxu0 %v1241
  %v1312 = vpop.f32.mrf.mxu0
  %v1313 = vadd.f32 %v1238, %v1312
  %v1314 = vpop.f32.mrf.mxu0
  %1315 = vmatprep.mubr.f32.mxu0 0.0
  %1316 = vmatmul.mubr.f32.gmra.mxu0 %v1244
  %v1317 = vpop.f32.mrf.mxu0
  %v1318 = vadd.f32 %v1238, %v1317
  %v1319 = vpop.f32.mrf.mxu0
  %1320 = vdwg.mxu0
  %1321 = vst.msk [vmem:[%s12] sm:$0xff] %vm49, %v1313
  %1322 = vst.msk [vmem:[%s12 + $0x8] sm:$0xff] %vm49, %v1318
  // Predicated region
  $region50: #{gat_forward.1} parent=0 // pred_check
    _
  $region51: #{gat_forward.1} parent=0 // pred_check_branch
    %1324 = sbr.rel (0) target = $region53
  $region52: #{gat_forward.1} parent=0 // pred_region
    _
  $region53: #{gat_forward.1} parent=0 // pred_fallthru
    _
  // Predicated region
  $region54: #{gat_forward.1} parent=0 // pred_check
    _
  $region55: #{gat_forward.1} parent=0 // pred_check_branch
    %1326 = sbr.rel (0) target = $region57
  $region56: #{gat_forward.1} parent=0 // pred_region
    _
  $region57: #{gat_forward.1} parent=0 // pred_fallthru
    _

</llo_original>
